<compile_context>
chip_gen: v7x
topology: tpu7x:2x2x1
jax: 0.10.0
libtpu: 0.0.40
codegen_flags: <defaults>
</compile_context>

<pallas_src>
import jax
import jax.numpy as jnp
from jax.experimental import pallas as pl
from jax.experimental.pallas import tpu as pltpu


def _round_up(x, m):
    return (x + m - 1) // m * m


def _gru_kernel(gx_ref, w_hh_ref, b_hn_ref, w_fc_ref, b_fc_ref, out_ref, h_ref):
    """One (batch block, time block) grid step of the GRU recurrence.

    gx_ref   : (T_BLK, B_BLK, 3*Hp)  x_t @ W_ih + b_ih + b_h{r,z}, time-major,
                                     per-gate slabs lane-aligned (Hp % 128 == 0)
    w_hh_ref : (Hp, 3*Hp)            hidden->gates weight, gate order r | z | n
    b_hn_ref : (1, Hp)               n-gate hidden bias (cannot be folded: the
                                     GRU n-gate needs r * (h @ W_hn + b_hn))
    w_fc_ref : (1, Hp)               fc weight as a row vector
    b_fc_ref : (1, 1)                fc bias
    out_ref  : (B_BLK, 1)            fc(h_T), written on the last time block
    h_ref    : (B_BLK, Hp) scratch   hidden state carried across time blocks
    """
    t_idx = pl.program_id(1)

    @pl.when(t_idx == 0)
    def _():
        h_ref[...] = jnp.zeros_like(h_ref)

    t_blk, b_blk, _ = gx_ref.shape
    hp = w_hh_ref.shape[0]

    # Loop invariants: load / broadcast once, outside the (unrolled) step loop.
    w_hh = w_hh_ref[...]                                  # (Hp, 3*Hp)
    b_hn = jnp.broadcast_to(b_hn_ref[...], (b_blk, hp))   # (B_BLK, Hp)

    def step(t, h):
        gxt = gx_ref[t]                                   # (B_BLK, 3*Hp)
        # One fused MXU matmul per step for all three gates.
        gh = jnp.dot(h, w_hh, preferred_element_type=jnp.float32)
        # r and z fused: one add + one sigmoid over a lane-aligned 2*Hp slab.
        rz = jax.nn.sigmoid(gxt[:, :2 * hp] + gh[:, :2 * hp])
        r = rz[:, :hp]
        z = rz[:, hp:]
        n = jnp.tanh(gxt[:, 2 * hp:] + r * (gh[:, 2 * hp:] + b_hn))
        return (1.0 - z) * n + z * h

    h = jax.lax.fori_loop(0, t_blk, step, h_ref[...], unroll=min(t_blk, 8))
    h_ref[...] = h

    @pl.when(t_idx == pl.num_programs(1) - 1)
    def _():
        # Dropout(0.2) is identity at inference.
        # FC head (O=1): VPU multiply + lane reduction (no degenerate MXU matmul).
        out_ref[...] = (
            jnp.sum(h * w_fc_ref[...], axis=-1, keepdims=True) + b_fc_ref[...]
        ).astype(out_ref.dtype)


def _pick_time_block(T, bytes_per_step, budget_bytes=4 << 20, max_blk=64):
    """Largest divisor of T whose gx tile fits the per-buffer VMEM budget."""
    cap = max(1, min(max_blk, budget_bytes // max(bytes_per_step, 1)))
    best = 1
    for d in range(1, T + 1):
        if T % d == 0 and d <= cap:
            best = d
    return best


def gru_model_forward(x_btI, params):
    """x_btI: (B, T, input_size) float32, batch_first like the PyTorch module."""
    w_ih, b_ih, w_hh, b_hh, w_fc, b_fc = params
    B, T, I = x_btI.shape
    H = w_hh.shape[0]

    b_pad = _round_up(B, 8)       # full sublanes
    h_pad = _round_up(H, 128)     # lane-aligned per-gate slabs
    g_pad = 3 * h_pad

    # ---- Pad weights into a lane-aligned, per-gate-slab layout. Padded rows /
    #      columns are zero, which keeps padded hidden lanes exactly 0 through
    #      the recurrence (r = z = 0.5, n = 0 on padding => h stays 0).
    def pad_gates(w):
        out = jnp.zeros((w.shape[0], g_pad), jnp.float32)
        for g in range(3):
            out = out.at[:, g * h_pad:g * h_pad + H].set(w[:, g * H:(g + 1) * H])
        return out

    w_ih_p = pad_gates(w_ih)                                   # (I, 3*Hp)
    w_hh_p = jnp.zeros((h_pad, g_pad), jnp.float32)
    w_hh_p = w_hh_p.at[:H].set(pad_gates(w_hh))                # (Hp, 3*Hp)

    # Fold b_ih fully and the r/z halves of b_hh into the input-projection bias.
    b_fold = jnp.zeros((1, g_pad), jnp.float32)
    for g in range(3):
        b_fold = b_fold.at[:, g * h_pad:g * h_pad + H].set(b_ih[:, g * H:(g + 1) * H])
    for g in range(2):  # r, z only; b_hn must stay separate
        b_fold = b_fold.at[:, g * h_pad:g * h_pad + H].add(b_hh[:, g * H:(g + 1) * H])
    b_hn_p = jnp.zeros((1, h_pad), jnp.float32).at[:, :H].set(b_hh[:, 2 * H:])
    w_fc_p = jnp.zeros((1, h_pad), jnp.float32).at[0, :H].set(w_fc[:, 0])
    b_fc_p = b_fc.reshape(1, 1).astype(jnp.float32)

    # ---- Hoisted input projection for all timesteps: one (B*T, I) x (I, 3*Hp)
    #      matmul at default single-pass MXU precision, f32 accumulation. The
    #      einsum output is time-major, folding the batch_first -> time-major
    #      transpose for free.
    gx = jnp.einsum("bti,ig->tbg", x_btI, w_ih_p,
                    preferred_element_type=jnp.float32) + b_fold     # (T, B, 3*Hp)
    if b_pad != B:
        gx = jnp.pad(gx, ((0, 0), (0, b_pad - B), (0, 0)))

    # ---- Grid: ("parallel" batch blocks) x ("arbitrary" time blocks).
    #      Two batch blocks when there is enough batch to shard across v7x's two
    #      TensorCores; a single block otherwise (no-op on v5e/v6e, 1 TC).
    n_b_blocks = 2 if (b_pad >= 16 and b_pad % 16 == 0) else 1
    b_blk = b_pad // n_b_blocks

    t_blk = _pick_time_block(T, bytes_per_step=b_blk * g_pad * 4)
    n_t_blocks = T // t_blk

    # VMEM budget: double-buffered gx tile + resident weights + h scratch + out,
    # capped well under v7x's 64 MiB physical VMEM.
    gx_block_bytes = t_blk * b_blk * g_pad * 4
    weight_bytes = (h_pad * g_pad + 2 * h_pad + 1) * 4
    need = 2 * gx_block_bytes + 2 * weight_bytes + b_blk * (h_pad + 1) * 4
    vmem_limit = int(min(max(2 * need, 8 << 20), 48 << 20))

    cost = pl.CostEstimate(
        flops=2 * T * b_pad * h_pad * g_pad + 2 * b_pad * h_pad,
        transcendentals=3 * T * b_pad * h_pad,
        bytes_accessed=4 * (gx.size + w_hh_p.size + b_hn_p.size
                            + w_fc_p.size + b_fc_p.size + b_pad),
    )

    out_pad = pl.pallas_call(
        _gru_kernel,
        out_shape=jax.ShapeDtypeStruct((b_pad, 1), jnp.float32),
        grid_spec=pltpu.PrefetchScalarGridSpec(
            num_scalar_prefetch=0,
            grid=(n_b_blocks, n_t_blocks),
            in_specs=[
                pl.BlockSpec((t_blk, b_blk, g_pad), lambda b, t: (t, b, 0)),
                pl.BlockSpec((h_pad, g_pad), lambda b, t: (0, 0)),
                pl.BlockSpec((1, h_pad), lambda b, t: (0, 0)),
                pl.BlockSpec((1, h_pad), lambda b, t: (0, 0)),
                pl.BlockSpec((1, 1), lambda b, t: (0, 0)),
            ],
            out_specs=pl.BlockSpec((b_blk, 1), lambda b, t: (b, 0)),
            scratch_shapes=[pltpu.VMEM((b_blk, h_pad), jnp.float32)],
        ),
        compiler_params=pltpu.CompilerParams(
            dimension_semantics=("parallel", "arbitrary"),
            vmem_limit_bytes=vmem_limit,
        ),
        cost_estimate=cost,
    )(gx, w_hh_p, b_hn_p, w_fc_p, b_fc_p)

    return out_pad[:B]


def gru_model_reference(x_btI, params):
    """Pure-JAX reference matching PyTorch nn.GRU(batch_first) + Linear(H, 1)."""
    w_ih, b_ih, w_hh, b_hh, w_fc, b_fc = params
    H = w_hh.shape[0]

    def step(h, x_t):
        gx = jnp.dot(x_t, w_ih, preferred_element_type=jnp.float32) + b_ih[0]
        gh = jnp.dot(h, w_hh, preferred_element_type=jnp.float32) + b_hh[0]
        r = jax.nn.sigmoid(gx[:, :H] + gh[:, :H])
        z = jax.nn.sigmoid(gx[:, H:2 * H] + gh[:, H:2 * H])
        n = jnp.tanh(gx[:, 2 * H:] + r * gh[:, 2 * H:])
        return (1.0 - z) * n + z * h, None

    h0 = jnp.zeros((x_btI.shape[0], H), jnp.float32)
    h_last, _ = jax.lax.scan(step, h0, jnp.transpose(x_btI, (1, 0, 2)))
    # Dropout(0.2) is identity at inference.
    return jnp.dot(h_last, w_fc, preferred_element_type=jnp.float32) + b_fc[0]


def init_params(key, input_size, hidden_size):
    """Deterministic init mimicking PyTorch's U(-1/sqrt(H), 1/sqrt(H)).

    Weights are stored pre-transposed (in_features, out_features) so the math
    is x @ W. Gate column order matches PyTorch nn.GRU: r | z | n. b_ih and
    b_hh are kept separate (required by the GRU n-gate formula).
    """
    ks = jax.random.split(key, 6)
    bound = 1.0 / jnp.sqrt(jnp.float32(hidden_size))
    H3 = 3 * hidden_size
    w_ih = jax.random.uniform(ks[0], (input_size, H3), jnp.float32, -bound, bound)
    w_hh = jax.random.uniform(ks[1], (hidden_size, H3), jnp.float32, -bound, bound)
    b_ih = jax.random.uniform(ks[2], (1, H3), jnp.float32, -bound, bound)
    b_hh = jax.random.uniform(ks[3], (1, H3), jnp.float32, -bound, bound)
    w_fc = jax.random.uniform(ks[4], (hidden_size, 1), jnp.float32, -bound, bound)
    b_fc = jax.random.uniform(ks[5], (1, 1), jnp.float32, -bound, bound)
    return (w_ih, b_ih, w_hh, b_hh, w_fc, b_fc)


if __name__ == "__main__":
    # Small shapes consistent with the module: x is (B, T, input_size),
    # fc output size is 1 (nn.Linear(hidden_size, 1)).
    B, T = 2, 8
    input_size, hidden_size = 16, 32

    key = jax.random.PRNGKey(0)
    k_x, k_p = jax.random.split(key)
    x = jax.random.normal(k_x, (B, T, input_size), jnp.float32)
    params = init_params(k_p, input_size, hidden_size)

    out = jax.block_until_ready(gru_model_forward(x, params))
    ref = jax.block_until_ready(gru_model_reference(x, params))

    assert out.shape == (B, 1), out.shape
    max_err = jnp.max(jnp.abs(out - ref))
    assert jnp.allclose(out, ref, atol=1e-3, rtol=1e-3), f"max abs err {max_err}"
    print("KERNEL_OK")
</pallas_src>

<mosaic_0001>
module attributes {stable_mosaic.version = 11 : i64} {
  func.func @_gru_kernel(%arg0: i32, %arg1: i32, %arg2: memref<8x8x384xf32, #tpu.memory_space<vmem>>, %arg3: memref<128x384xf32, #tpu.memory_space<vmem>>, %arg4: memref<1x128xf32, #tpu.memory_space<vmem>>, %arg5: memref<1x128xf32, #tpu.memory_space<vmem>>, %arg6: memref<1x1xf32, #tpu.memory_space<vmem>>, %arg7: memref<8x1xf32, #tpu.memory_space<vmem>>, %arg8: memref<8x128xf32, #tpu.memory_space<vmem>>) attributes {dimension_semantics = [#tpu.dimension_semantics<parallel>, #tpu.dimension_semantics<arbitrary>], iteration_bounds = array<i64: 1, 1>, scalar_prefetch = 0 : i64, scratch_operands = 1 : i64, tpu.core_type = #tpu.core_type<tc>, window_params = [{transform_indices = @transform_0, window_bounds = array<i64: 8, 8, 384>}, {pipeline_mode = #tpu.pipeline_mode<synchronous>, transform_indices = @transform_1, window_bounds = array<i64: 128, 384>}, {pipeline_mode = #tpu.pipeline_mode<synchronous>, transform_indices = @transform_2, window_bounds = array<i64: 1, 128>}, {pipeline_mode = #tpu.pipeline_mode<synchronous>, transform_indices = @transform_3, window_bounds = array<i64: 1, 128>}, {pipeline_mode = #tpu.pipeline_mode<synchronous>, transform_indices = @transform_4, window_bounds = array<i64: 1, 1>}, {transform_indices = @transform_5, window_bounds = array<i64: 8, 1>}]} {
    %c0_i32 = arith.constant 0 : i32
    %0 = arith.cmpi eq, %arg1, %c0_i32 : i32
    %1 = arith.extui %0 : i1 to i32
    %c0_i32_0 = arith.constant 0 : i32
    %2 = arith.cmpi ne, %1, %c0_i32_0 : i32
    scf.if %2 {
      %cst_50 = arith.constant 0.000000e+00 : f32
      %212 = vector.broadcast %cst_50 : f32 to vector<8x128xf32>
      %c0_51 = arith.constant 0 : index
      %c0_52 = arith.constant 0 : index
      %213 = vector.load %arg8[%c0_51, %c0_52] : memref<8x128xf32, #tpu.memory_space<vmem>>, vector<8x128xf32>
      tpu.vector_store %arg8[%c0_51, %c0_52], %212 {strides = array<i32>} : memref<8x128xf32, #tpu.memory_space<vmem>>, vector<8x128xf32>,
    } else {
    }
    %c0 = arith.constant 0 : index
    %c0_1 = arith.constant 0 : index
    %3 = vector.load %arg3[%c0, %c0_1] : memref<128x384xf32, #tpu.memory_space<vmem>>, vector<128x384xf32>
    %c0_2 = arith.constant 0 : index
    %c0_3 = arith.constant 0 : index
    %4 = vector.load %arg4[%c0_2, %c0_3] : memref<1x128xf32, #tpu.memory_space<vmem>>, vector<1x128xf32>
    %5 = vector.shape_cast %4 : vector<1x128xf32> to vector<1x128xf32>
    %6 = vector.broadcast %5 : vector<1x128xf32> to vector<8x128xf32>
    %c0_4 = arith.constant 0 : index
    %c0_5 = arith.constant 0 : index
    %7 = vector.load %arg8[%c0_4, %c0_5] : memref<8x128xf32, #tpu.memory_space<vmem>>, vector<8x128xf32>
    %c0_i32_6 = arith.constant 0 : i32
    %8 = arith.index_cast %c0_i32_6 : i32 to index
    %c0_7 = arith.constant 0 : index
    %c0_8 = arith.constant 0 : index
    %9 = vector.load %arg2[%8, %c0_7, %c0_8] : memref<8x8x384xf32, #tpu.memory_space<vmem>>, vector<1x8x384xf32>
    %10 = vector.shape_cast %9 : vector<1x8x384xf32> to vector<8x384xf32>
    %cst = arith.constant dense<0.000000e+00> : vector<8x384xf32>
    %11 = tpu.matmul %7, %3, %cst {dimension_numbers = #tpu.dot_dimension_numbers<[1], [0], [0], [1], [0, 0, 1, 1], [], []>} : vector<8x128xf32>, vector<128x384xf32>, vector<8x384xf32> -> vector<8x384xf32>
    %12 = vector.extract_strided_slice %10 {offsets = [0, 0], sizes = [8, 256], strides = [1, 1]} : vector<8x384xf32> to vector<8x256xf32>
    %13 = vector.extract_strided_slice %11 {offsets = [0, 0], sizes = [8, 256], strides = [1, 1]} : vector<8x384xf32> to vector<8x256xf32>
    %14 = arith.addf %12, %13 : vector<8x256xf32>
    %15 = arith.negf %14 : vector<8x256xf32>
    %16 = math.exp %15 : vector<8x256xf32>
    %cst_9 = arith.constant 1.000000e+00 : f32
    %17 = vector.broadcast %cst_9 : f32 to vector<8x256xf32>
    %18 = arith.addf %17, %16 : vector<8x256xf32>
    %19 = arith.divf %17, %18 : vector<8x256xf32>
    %20 = vector.extract_strided_slice %19 {offsets = [0, 0], sizes = [8, 128], strides = [1, 1]} : vector<8x256xf32> to vector<8x128xf32>
    %21 = vector.extract_strided_slice %19 {offsets = [0, 128], sizes = [8, 128], strides = [1, 1]} : vector<8x256xf32> to vector<8x128xf32>
    %22 = vector.extract_strided_slice %10 {offsets = [0, 256], sizes = [8, 128], strides = [1, 1]} : vector<8x384xf32> to vector<8x128xf32>
    %23 = vector.extract_strided_slice %11 {offsets = [0, 256], sizes = [8, 128], strides = [1, 1]} : vector<8x384xf32> to vector<8x128xf32>
    %24 = arith.addf %23, %6 : vector<8x128xf32>
    %25 = arith.mulf %20, %24 : vector<8x128xf32>
    %26 = arith.addf %22, %25 : vector<8x128xf32>
    %27 = math.tanh %26 : vector<8x128xf32>
    %cst_10 = arith.constant 1.000000e+00 : f32
    %28 = vector.broadcast %cst_10 : f32 to vector<8x128xf32>
    %29 = arith.subf %28, %21 : vector<8x128xf32>
    %30 = arith.mulf %29, %27 : vector<8x128xf32>
    %31 = arith.mulf %21, %7 : vector<8x128xf32>
    %32 = arith.addf %30, %31 : vector<8x128xf32>
    %c1_i32 = arith.constant 1 : i32
    %33 = arith.index_cast %c1_i32 : i32 to index
    %c0_11 = arith.constant 0 : index
    %c0_12 = arith.constant 0 : index
    %34 = vector.load %arg2[%33, %c0_11, %c0_12] : memref<8x8x384xf32, #tpu.memory_space<vmem>>, vector<1x8x384xf32>
    %35 = vector.shape_cast %34 : vector<1x8x384xf32> to vector<8x384xf32>
    %cst_13 = arith.constant dense<0.000000e+00> : vector<8x384xf32>
    %36 = tpu.matmul %32, %3, %cst_13 {dimension_numbers = #tpu.dot_dimension_numbers<[1], [0], [0], [1], [0, 0, 1, 1], [], []>} : vector<8x128xf32>, vector<128x384xf32>, vector<8x384xf32> -> vector<8x384xf32>
    %37 = vector.extract_strided_slice %35 {offsets = [0, 0], sizes = [8, 256], strides = [1, 1]} : vector<8x384xf32> to vector<8x256xf32>
    %38 = vector.extract_strided_slice %36 {offsets = [0, 0], sizes = [8, 256], strides = [1, 1]} : vector<8x384xf32> to vector<8x256xf32>
    %39 = arith.addf %37, %38 : vector<8x256xf32>
    %40 = arith.negf %39 : vector<8x256xf32>
    %41 = math.exp %40 : vector<8x256xf32>
    %cst_14 = arith.constant 1.000000e+00 : f32
    %42 = vector.broadcast %cst_14 : f32 to vector<8x256xf32>
    %43 = arith.addf %42, %41 : vector<8x256xf32>
    %44 = arith.divf %42, %43 : vector<8x256xf32>
    %45 = vector.extract_strided_slice %44 {offsets = [0, 0], sizes = [8, 128], strides = [1, 1]} : vector<8x256xf32> to vector<8x128xf32>
    %46 = vector.extract_strided_slice %44 {offsets = [0, 128], sizes = [8, 128], strides = [1, 1]} : vector<8x256xf32> to vector<8x128xf32>
    %47 = vector.extract_strided_slice %35 {offsets = [0, 256], sizes = [8, 128], strides = [1, 1]} : vector<8x384xf32> to vector<8x128xf32>
    %48 = vector.extract_strided_slice %36 {offsets = [0, 256], sizes = [8, 128], strides = [1, 1]} : vector<8x384xf32> to vector<8x128xf32>
    %49 = arith.addf %48, %6 : vector<8x128xf32>
    %50 = arith.mulf %45, %49 : vector<8x128xf32>
    %51 = arith.addf %47, %50 : vector<8x128xf32>
    %52 = math.tanh %51 : vector<8x128xf32>
    %cst_15 = arith.constant 1.000000e+00 : f32
    %53 = vector.broadcast %cst_15 : f32 to vector<8x128xf32>
    %54 = arith.subf %53, %46 : vector<8x128xf32>
    %55 = arith.mulf %54, %52 : vector<8x128xf32>
    %56 = arith.mulf %46, %32 : vector<8x128xf32>
    %57 = arith.addf %55, %56 : vector<8x128xf32>
    %c2_i32 = arith.constant 2 : i32
    %58 = arith.index_cast %c2_i32 : i32 to index
    %c0_16 = arith.constant 0 : index
    %c0_17 = arith.constant 0 : index
    %59 = vector.load %arg2[%58, %c0_16, %c0_17] : memref<8x8x384xf32, #tpu.memory_space<vmem>>, vector<1x8x384xf32>
    %60 = vector.shape_cast %59 : vector<1x8x384xf32> to vector<8x384xf32>
    %cst_18 = arith.constant dense<0.000000e+00> : vector<8x384xf32>
    %61 = tpu.matmul %57, %3, %cst_18 {dimension_numbers = #tpu.dot_dimension_numbers<[1], [0], [0], [1], [0, 0, 1, 1], [], []>} : vector<8x128xf32>, vector<128x384xf32>, vector<8x384xf32> -> vector<8x384xf32>
    %62 = vector.extract_strided_slice %60 {offsets = [0, 0], sizes = [8, 256], strides = [1, 1]} : vector<8x384xf32> to vector<8x256xf32>
    %63 = vector.extract_strided_slice %61 {offsets = [0, 0], sizes = [8, 256], strides = [1, 1]} : vector<8x384xf32> to vector<8x256xf32>
    %64 = arith.addf %62, %63 : vector<8x256xf32>
    %65 = arith.negf %64 : vector<8x256xf32>
    %66 = math.exp %65 : vector<8x256xf32>
    %cst_19 = arith.constant 1.000000e+00 : f32
    %67 = vector.broadcast %cst_19 : f32 to vector<8x256xf32>
    %68 = arith.addf %67, %66 : vector<8x256xf32>
    %69 = arith.divf %67, %68 : vector<8x256xf32>
    %70 = vector.extract_strided_slice %69 {offsets = [0, 0], sizes = [8, 128], strides = [1, 1]} : vector<8x256xf32> to vector<8x128xf32>
    %71 = vector.extract_strided_slice %69 {offsets = [0, 128], sizes = [8, 128], strides = [1, 1]} : vector<8x256xf32> to vector<8x128xf32>
    %72 = vector.extract_strided_slice %60 {offsets = [0, 256], sizes = [8, 128], strides = [1, 1]} : vector<8x384xf32> to vector<8x128xf32>
    %73 = vector.extract_strided_slice %61 {offsets = [0, 256], sizes = [8, 128], strides = [1, 1]} : vector<8x384xf32> to vector<8x128xf32>
    %74 = arith.addf %73, %6 : vector<8x128xf32>
    %75 = arith.mulf %70, %74 : vector<8x128xf32>
    %76 = arith.addf %72, %75 : vector<8x128xf32>
    %77 = math.tanh %76 : vector<8x128xf32>
    %cst_20 = arith.constant 1.000000e+00 : f32
    %78 = vector.broadcast %cst_20 : f32 to vector<8x128xf32>
    %79 = arith.subf %78, %71 : vector<8x128xf32>
    %80 = arith.mulf %79, %77 : vector<8x128xf32>
    %81 = arith.mulf %71, %57 : vector<8x128xf32>
    %82 = arith.addf %80, %81 : vector<8x128xf32>
    %c3_i32 = arith.constant 3 : i32
    %83 = arith.index_cast %c3_i32 : i32 to index
    %c0_21 = arith.constant 0 : index
    %c0_22 = arith.constant 0 : index
    %84 = vector.load %arg2[%83, %c0_21, %c0_22] : memref<8x8x384xf32, #tpu.memory_space<vmem>>, vector<1x8x384xf32>
    %85 = vector.shape_cast %84 : vector<1x8x384xf32> to vector<8x384xf32>
    %cst_23 = arith.constant dense<0.000000e+00> : vector<8x384xf32>
    %86 = tpu.matmul %82, %3, %cst_23 {dimension_numbers = #tpu.dot_dimension_numbers<[1], [0], [0], [1], [0, 0, 1, 1], [], []>} : vector<8x128xf32>, vector<128x384xf32>, vector<8x384xf32> -> vector<8x384xf32>
    %87 = vector.extract_strided_slice %85 {offsets = [0, 0], sizes = [8, 256], strides = [1, 1]} : vector<8x384xf32> to vector<8x256xf32>
    %88 = vector.extract_strided_slice %86 {offsets = [0, 0], sizes = [8, 256], strides = [1, 1]} : vector<8x384xf32> to vector<8x256xf32>
    %89 = arith.addf %87, %88 : vector<8x256xf32>
    %90 = arith.negf %89 : vector<8x256xf32>
    %91 = math.exp %90 : vector<8x256xf32>
    %cst_24 = arith.constant 1.000000e+00 : f32
    %92 = vector.broadcast %cst_24 : f32 to vector<8x256xf32>
    %93 = arith.addf %92, %91 : vector<8x256xf32>
    %94 = arith.divf %92, %93 : vector<8x256xf32>
    %95 = vector.extract_strided_slice %94 {offsets = [0, 0], sizes = [8, 128], strides = [1, 1]} : vector<8x256xf32> to vector<8x128xf32>
    %96 = vector.extract_strided_slice %94 {offsets = [0, 128], sizes = [8, 128], strides = [1, 1]} : vector<8x256xf32> to vector<8x128xf32>
    %97 = vector.extract_strided_slice %85 {offsets = [0, 256], sizes = [8, 128], strides = [1, 1]} : vector<8x384xf32> to vector<8x128xf32>
    %98 = vector.extract_strided_slice %86 {offsets = [0, 256], sizes = [8, 128], strides = [1, 1]} : vector<8x384xf32> to vector<8x128xf32>
    %99 = arith.addf %98, %6 : vector<8x128xf32>
    %100 = arith.mulf %95, %99 : vector<8x128xf32>
    %101 = arith.addf %97, %100 : vector<8x128xf32>
    %102 = math.tanh %101 : vector<8x128xf32>
    %cst_25 = arith.constant 1.000000e+00 : f32
    %103 = vector.broadcast %cst_25 : f32 to vector<8x128xf32>
    %104 = arith.subf %103, %96 : vector<8x128xf32>
    %105 = arith.mulf %104, %102 : vector<8x128xf32>
    %106 = arith.mulf %96, %82 : vector<8x128xf32>
    %107 = arith.addf %105, %106 : vector<8x128xf32>
    %c4_i32 = arith.constant 4 : i32
    %108 = arith.index_cast %c4_i32 : i32 to index
    %c0_26 = arith.constant 0 : index
    %c0_27 = arith.constant 0 : index
    %109 = vector.load %arg2[%108, %c0_26, %c0_27] : memref<8x8x384xf32, #tpu.memory_space<vmem>>, vector<1x8x384xf32>
    %110 = vector.shape_cast %109 : vector<1x8x384xf32> to vector<8x384xf32>
    %cst_28 = arith.constant dense<0.000000e+00> : vector<8x384xf32>
    %111 = tpu.matmul %107, %3, %cst_28 {dimension_numbers = #tpu.dot_dimension_numbers<[1], [0], [0], [1], [0, 0, 1, 1], [], []>} : vector<8x128xf32>, vector<128x384xf32>, vector<8x384xf32> -> vector<8x384xf32>
    %112 = vector.extract_strided_slice %110 {offsets = [0, 0], sizes = [8, 256], strides = [1, 1]} : vector<8x384xf32> to vector<8x256xf32>
    %113 = vector.extract_strided_slice %111 {offsets = [0, 0], sizes = [8, 256], strides = [1, 1]} : vector<8x384xf32> to vector<8x256xf32>
    %114 = arith.addf %112, %113 : vector<8x256xf32>
    %115 = arith.negf %114 : vector<8x256xf32>
    %116 = math.exp %115 : vector<8x256xf32>
    %cst_29 = arith.constant 1.000000e+00 : f32
    %117 = vector.broadcast %cst_29 : f32 to vector<8x256xf32>
    %118 = arith.addf %117, %116 : vector<8x256xf32>
    %119 = arith.divf %117, %118 : vector<8x256xf32>
    %120 = vector.extract_strided_slice %119 {offsets = [0, 0], sizes = [8, 128], strides = [1, 1]} : vector<8x256xf32> to vector<8x128xf32>
    %121 = vector.extract_strided_slice %119 {offsets = [0, 128], sizes = [8, 128], strides = [1, 1]} : vector<8x256xf32> to vector<8x128xf32>
    %122 = vector.extract_strided_slice %110 {offsets = [0, 256], sizes = [8, 128], strides = [1, 1]} : vector<8x384xf32> to vector<8x128xf32>
    %123 = vector.extract_strided_slice %111 {offsets = [0, 256], sizes = [8, 128], strides = [1, 1]} : vector<8x384xf32> to vector<8x128xf32>
    %124 = arith.addf %123, %6 : vector<8x128xf32>
    %125 = arith.mulf %120, %124 : vector<8x128xf32>
    %126 = arith.addf %122, %125 : vector<8x128xf32>
    %127 = math.tanh %126 : vector<8x128xf32>
    %cst_30 = arith.constant 1.000000e+00 : f32
    %128 = vector.broadcast %cst_30 : f32 to vector<8x128xf32>
    %129 = arith.subf %128, %121 : vector<8x128xf32>
    %130 = arith.mulf %129, %127 : vector<8x128xf32>
    %131 = arith.mulf %121, %107 : vector<8x128xf32>
    %132 = arith.addf %130, %131 : vector<8x128xf32>
    %c5_i32 = arith.constant 5 : i32
    %133 = arith.index_cast %c5_i32 : i32 to index
    %c0_31 = arith.constant 0 : index
    %c0_32 = arith.constant 0 : index
    %134 = vector.load %arg2[%133, %c0_31, %c0_32] : memref<8x8x384xf32, #tpu.memory_space<vmem>>, vector<1x8x384xf32>
    %135 = vector.shape_cast %134 : vector<1x8x384xf32> to vector<8x384xf32>
    %cst_33 = arith.constant dense<0.000000e+00> : vector<8x384xf32>
    %136 = tpu.matmul %132, %3, %cst_33 {dimension_numbers = #tpu.dot_dimension_numbers<[1], [0], [0], [1], [0, 0, 1, 1], [], []>} : vector<8x128xf32>, vector<128x384xf32>, vector<8x384xf32> -> vector<8x384xf32>
    %137 = vector.extract_strided_slice %135 {offsets = [0, 0], sizes = [8, 256], strides = [1, 1]} : vector<8x384xf32> to vector<8x256xf32>
    %138 = vector.extract_strided_slice %136 {offsets = [0, 0], sizes = [8, 256], strides = [1, 1]} : vector<8x384xf32> to vector<8x256xf32>
    %139 = arith.addf %137, %138 : vector<8x256xf32>
    %140 = arith.negf %139 : vector<8x256xf32>
    %141 = math.exp %140 : vector<8x256xf32>
    %cst_34 = arith.constant 1.000000e+00 : f32
    %142 = vector.broadcast %cst_34 : f32 to vector<8x256xf32>
    %143 = arith.addf %142, %141 : vector<8x256xf32>
    %144 = arith.divf %142, %143 : vector<8x256xf32>
    %145 = vector.extract_strided_slice %144 {offsets = [0, 0], sizes = [8, 128], strides = [1, 1]} : vector<8x256xf32> to vector<8x128xf32>
    %146 = vector.extract_strided_slice %144 {offsets = [0, 128], sizes = [8, 128], strides = [1, 1]} : vector<8x256xf32> to vector<8x128xf32>
    %147 = vector.extract_strided_slice %135 {offsets = [0, 256], sizes = [8, 128], strides = [1, 1]} : vector<8x384xf32> to vector<8x128xf32>
    %148 = vector.extract_strided_slice %136 {offsets = [0, 256], sizes = [8, 128], strides = [1, 1]} : vector<8x384xf32> to vector<8x128xf32>
    %149 = arith.addf %148, %6 : vector<8x128xf32>
    %150 = arith.mulf %145, %149 : vector<8x128xf32>
    %151 = arith.addf %147, %150 : vector<8x128xf32>
    %152 = math.tanh %151 : vector<8x128xf32>
    %cst_35 = arith.constant 1.000000e+00 : f32
    %153 = vector.broadcast %cst_35 : f32 to vector<8x128xf32>
    %154 = arith.subf %153, %146 : vector<8x128xf32>
    %155 = arith.mulf %154, %152 : vector<8x128xf32>
    %156 = arith.mulf %146, %132 : vector<8x128xf32>
    %157 = arith.addf %155, %156 : vector<8x128xf32>
    %c6_i32 = arith.constant 6 : i32
    %158 = arith.index_cast %c6_i32 : i32 to index
    %c0_36 = arith.constant 0 : index
    %c0_37 = arith.constant 0 : index
    %159 = vector.load %arg2[%158, %c0_36, %c0_37] : memref<8x8x384xf32, #tpu.memory_space<vmem>>, vector<1x8x384xf32>
    %160 = vector.shape_cast %159 : vector<1x8x384xf32> to vector<8x384xf32>
    %cst_38 = arith.constant dense<0.000000e+00> : vector<8x384xf32>
    %161 = tpu.matmul %157, %3, %cst_38 {dimension_numbers = #tpu.dot_dimension_numbers<[1], [0], [0], [1], [0, 0, 1, 1], [], []>} : vector<8x128xf32>, vector<128x384xf32>, vector<8x384xf32> -> vector<8x384xf32>
    %162 = vector.extract_strided_slice %160 {offsets = [0, 0], sizes = [8, 256], strides = [1, 1]} : vector<8x384xf32> to vector<8x256xf32>
    %163 = vector.extract_strided_slice %161 {offsets = [0, 0], sizes = [8, 256], strides = [1, 1]} : vector<8x384xf32> to vector<8x256xf32>
    %164 = arith.addf %162, %163 : vector<8x256xf32>
    %165 = arith.negf %164 : vector<8x256xf32>
    %166 = math.exp %165 : vector<8x256xf32>
    %cst_39 = arith.constant 1.000000e+00 : f32
    %167 = vector.broadcast %cst_39 : f32 to vector<8x256xf32>
    %168 = arith.addf %167, %166 : vector<8x256xf32>
    %169 = arith.divf %167, %168 : vector<8x256xf32>
    %170 = vector.extract_strided_slice %169 {offsets = [0, 0], sizes = [8, 128], strides = [1, 1]} : vector<8x256xf32> to vector<8x128xf32>
    %171 = vector.extract_strided_slice %169 {offsets = [0, 128], sizes = [8, 128], strides = [1, 1]} : vector<8x256xf32> to vector<8x128xf32>
    %172 = vector.extract_strided_slice %160 {offsets = [0, 256], sizes = [8, 128], strides = [1, 1]} : vector<8x384xf32> to vector<8x128xf32>
    %173 = vector.extract_strided_slice %161 {offsets = [0, 256], sizes = [8, 128], strides = [1, 1]} : vector<8x384xf32> to vector<8x128xf32>
    %174 = arith.addf %173, %6 : vector<8x128xf32>
    %175 = arith.mulf %170, %174 : vector<8x128xf32>
    %176 = arith.addf %172, %175 : vector<8x128xf32>
    %177 = math.tanh %176 : vector<8x128xf32>
    %cst_40 = arith.constant 1.000000e+00 : f32
    %178 = vector.broadcast %cst_40 : f32 to vector<8x128xf32>
    %179 = arith.subf %178, %171 : vector<8x128xf32>
    %180 = arith.mulf %179, %177 : vector<8x128xf32>
    %181 = arith.mulf %171, %157 : vector<8x128xf32>
    %182 = arith.addf %180, %181 : vector<8x128xf32>
    %c7_i32 = arith.constant 7 : i32
    %183 = arith.index_cast %c7_i32 : i32 to index
    %c0_41 = arith.constant 0 : index
    %c0_42 = arith.constant 0 : index
    %184 = vector.load %arg2[%183, %c0_41, %c0_42] : memref<8x8x384xf32, #tpu.memory_space<vmem>>, vector<1x8x384xf32>
    %185 = vector.shape_cast %184 : vector<1x8x384xf32> to vector<8x384xf32>
    %cst_43 = arith.constant dense<0.000000e+00> : vector<8x384xf32>
    %186 = tpu.matmul %182, %3, %cst_43 {dimension_numbers = #tpu.dot_dimension_numbers<[1], [0], [0], [1], [0, 0, 1, 1], [], []>} : vector<8x128xf32>, vector<128x384xf32>, vector<8x384xf32> -> vector<8x384xf32>
    %187 = vector.extract_strided_slice %185 {offsets = [0, 0], sizes = [8, 256], strides = [1, 1]} : vector<8x384xf32> to vector<8x256xf32>
    %188 = vector.extract_strided_slice %186 {offsets = [0, 0], sizes = [8, 256], strides = [1, 1]} : vector<8x384xf32> to vector<8x256xf32>
    %189 = arith.addf %187, %188 : vector<8x256xf32>
    %190 = arith.negf %189 : vector<8x256xf32>
    %191 = math.exp %190 : vector<8x256xf32>
    %cst_44 = arith.constant 1.000000e+00 : f32
    %192 = vector.broadcast %cst_44 : f32 to vector<8x256xf32>
    %193 = arith.addf %192, %191 : vector<8x256xf32>
    %194 = arith.divf %192, %193 : vector<8x256xf32>
    %195 = vector.extract_strided_slice %194 {offsets = [0, 0], sizes = [8, 128], strides = [1, 1]} : vector<8x256xf32> to vector<8x128xf32>
    %196 = vector.extract_strided_slice %194 {offsets = [0, 128], sizes = [8, 128], strides = [1, 1]} : vector<8x256xf32> to vector<8x128xf32>
    %197 = vector.extract_strided_slice %185 {offsets = [0, 256], sizes = [8, 128], strides = [1, 1]} : vector<8x384xf32> to vector<8x128xf32>
    %198 = vector.extract_strided_slice %186 {offsets = [0, 256], sizes = [8, 128], strides = [1, 1]} : vector<8x384xf32> to vector<8x128xf32>
    %199 = arith.addf %198, %6 : vector<8x128xf32>
    %200 = arith.mulf %195, %199 : vector<8x128xf32>
    %201 = arith.addf %197, %200 : vector<8x128xf32>
    %202 = math.tanh %201 : vector<8x128xf32>
    %cst_45 = arith.constant 1.000000e+00 : f32
    %203 = vector.broadcast %cst_45 : f32 to vector<8x128xf32>
    %204 = arith.subf %203, %196 : vector<8x128xf32>
    %205 = arith.mulf %204, %202 : vector<8x128xf32>
    %206 = arith.mulf %196, %182 : vector<8x128xf32>
    %207 = arith.addf %205, %206 : vector<8x128xf32>
    %c8_i32 = arith.constant 8 : i32
    %c0_46 = arith.constant 0 : index
    %c0_47 = arith.constant 0 : index
    %208 = vector.load %arg8[%c0_46, %c0_47] : memref<8x128xf32, #tpu.memory_space<vmem>>, vector<8x128xf32>
    tpu.vector_store %arg8[%c0_46, %c0_47], %207 {strides = array<i32>} : memref<8x128xf32, #tpu.memory_space<vmem>>, vector<8x128xf32>,
    %c0_i32_48 = arith.constant 0 : i32
    %209 = arith.cmpi eq, %arg1, %c0_i32_48 : i32
    %210 = arith.extui %209 : i1 to i32
    %c0_i32_49 = arith.constant 0 : i32
    %211 = arith.cmpi ne, %210, %c0_i32_49 : i32
    scf.if %211 {
      %c0_50 = arith.constant 0 : index
      %c0_51 = arith.constant 0 : index
      %212 = vector.load %arg5[%c0_50, %c0_51] : memref<1x128xf32, #tpu.memory_space<vmem>>, vector<1x128xf32>
      %213 = vector.broadcast %212 : vector<1x128xf32> to vector<8x128xf32>
      %214 = arith.mulf %207, %213 : vector<8x128xf32>
      %cst_52 = arith.constant dense<0.000000e+00> : vector<8xf32>
      %215 = vector.multi_reduction <add>, %214, %cst_52 [1] : vector<8x128xf32> to vector<8xf32>
      %216 = vector.shape_cast %215 : vector<8xf32> to vector<8x1xf32>
      %c0_53 = arith.constant 0 : index
      %c0_54 = arith.constant 0 : index
      %217 = vector.load %arg6[%c0_53, %c0_54] : memref<1x1xf32, #tpu.memory_space<vmem>>, vector<1x1xf32>
      %218 = vector.broadcast %217 : vector<1x1xf32> to vector<8x1xf32>
      %219 = arith.addf %216, %218 : vector<8x1xf32>
      %c0_55 = arith.constant 0 : index
      %c0_56 = arith.constant 0 : index
      %220 = vector.load %arg7[%c0_55, %c0_56] : memref<8x1xf32, #tpu.memory_space<vmem>>, vector<8x1xf32>
      tpu.vector_store %arg7[%c0_55, %c0_56], %219 {strides = array<i32>} : memref<8x1xf32, #tpu.memory_space<vmem>>, vector<8x1xf32>,
    } else {
    }
    return
  }
  func.func @transform_0(%arg0: i32, %arg1: i32) -> (i32, i32, i32) {
    %c0_i32 = arith.constant 0 : i32
    %c0_i32_0 = arith.constant 0 : i32
    return %arg1, %arg0, %c0_i32 : i32, i32, i32
  }
  func.func @transform_1(%arg0: i32, %arg1: i32) -> (i32, i32) {
    %c0_i32 = arith.constant 0 : i32
    %c0_i32_0 = arith.constant 0 : i32
    %c0_i32_1 = arith.constant 0 : i32
    return %c0_i32, %c0_i32_0 : i32, i32
  }
  func.func @transform_2(%arg0: i32, %arg1: i32) -> (i32, i32) {
    %c0_i32 = arith.constant 0 : i32
    %c0_i32_0 = arith.constant 0 : i32
    %c0_i32_1 = arith.constant 0 : i32
    return %c0_i32, %c0_i32_0 : i32, i32
  }
  func.func @transform_3(%arg0: i32, %arg1: i32) -> (i32, i32) {
    %c0_i32 = arith.constant 0 : i32
    %c0_i32_0 = arith.constant 0 : i32
    %c0_i32_1 = arith.constant 0 : i32
    return %c0_i32, %c0_i32_0 : i32, i32
  }
  func.func @transform_4(%arg0: i32, %arg1: i32) -> (i32, i32) {
    %c0_i32 = arith.constant 0 : i32
    %c0_i32_0 = arith.constant 0 : i32
    %c0_i32_1 = arith.constant 0 : i32
    return %c0_i32, %c0_i32_0 : i32, i32
  }
  func.func @transform_5(%arg0: i32, %arg1: i32) -> (i32, i32) {
    %c0_i32 = arith.constant 0 : i32
    %c0_i32_0 = arith.constant 0 : i32
    return %arg0, %c0_i32 : i32, i32
  }
}

</mosaic_0001>

<llo_original>
// kernel: tpu_custom_call.1
$region0: #{tpu_custom_call.1}
  #allocation0 [shape = 'u32[]', space=smem, size = 0x4, offset = 0x4, fixed_abs, tag = 'smem constant byte address 0x4 - core index']
  #allocation1 [shape = 'u32[144,128]{1,0:T(1,128)}', space=vmem, size = 0x12000, scoped, tag = 'internal scratch']
  #allocation2 [shape = 'f32[8,128]{1,0:T(8,128)}', space=vmem, size = 0x1000, scoped, tag = 'scratch operand']
  #allocation3 [shape = 'f32[1,1]{1,0:T(1,128)S(1)}', space=vmem, size = 0x200, scoped, tag = 'scoped memory for tpu_custom_call.1']
  %s0 = inlined_call_operand.hbm [shape: f32[8,8,384], index: 0, kind: input, shape index: {}]
  %s1 = inlined_call_operand.hbm [shape: f32[128,384], index: 1, kind: input, shape index: {}]
  %s2 = inlined_call_operand.vmem [shape: f32[1,128], index: 2, kind: input, shape index: {}]
  %s3 = inlined_call_operand.vmem [shape: f32[1,128], index: 3, kind: input, shape index: {}]
  %s4 = inlined_call_operand.<no memory space> [shape: f32[1,1], index: 4, kind: input, shape index: {}]
  %s5 = inlined_call_operand.vmem [shape: f32[8,1], index: 5, kind: output, shape index: {}]
  %s6 = sld [smem:[#allocation0]]
  $region46: #{tpu_custom_call.1} parent=0
    _
  %s8 = ssub.s32 1, %s6
  %s9 = scalar_select 0, %s8, %s6
  %v10 = vstv %s4
  %11 = vst [vmem:[#allocation3] sm:$0x1] %v10
  $region1: #{tpu_custom_call.1} parent=0
    #allocation4 [shape = 'u8[98304]{0}', space=vmem, size = 0x18000, scoped, tag = 'input window, operand 0, single buffered']
    #allocation5 [shape = 's32[1]{0}', space=sflag, size = 0x4, scoped, tag = 'scoped memory for tpu_custom_call.1']
    #allocation6 [shape = 'u8[196608]{0}', space=vmem, size = 0x30000, scoped, tag = 'input window, operand 1, single buffered']
    #allocation7 [shape = 's32[1]{0}', space=sflag, size = 0x4, scoped, tag = 'scoped memory for tpu_custom_call.1']
    %12 = vsyncpa [#allocation5], 0
    %13 = vsyncpa [#allocation7], 0
    // Predicated region
    $region2: #{tpu_custom_call.1} parent=1 // pred_check
      _
    $region3: #{tpu_custom_call.1} parent=1 // pred_check_branch
      %15 = sbr.rel (0) target = $region5
    $region4: #{tpu_custom_call.1} parent=1 // pred_region
      %s17 = ssub.s32 3072, 3072
      %18 = vsyncadd [#allocation5], %s17
      %s19 = sshll.u32 [#allocation4], 4
      %s20 = int_to_ptr.vmem [resolvable:$true] %s19
      %25 = dma.hbm_to_vmem [thread:$0]  %s0, 3072, %s20, [#allocation5], 384, 384, 24
    $region5: #{tpu_custom_call.1} parent=1 // pred_fallthru
      _
    // Predicated region
    $region6: #{tpu_custom_call.1} parent=1 // pred_check
      _
    $region7: #{tpu_custom_call.1} parent=1 // pred_check_branch
      %27 = sbr.rel (0) target = $region9
    $region8: #{tpu_custom_call.1} parent=1 // pred_region
      %s29 = ssub.s32 6144, 6144
      %30 = vsyncadd [#allocation7], %s29
      %s31 = sshll.u32 [#allocation6], 4
      %s32 = int_to_ptr.vmem [resolvable:$true] %s31
      %37 = dma.hbm_to_vmem [thread:$0]  %s1, 6144, %s32, [#allocation7], 384, 384, 24
    $region9: #{tpu_custom_call.1} parent=1 // pred_fallthru
      _
    // Predicated region
    $region10: #{tpu_custom_call.1} parent=1 // pred_check
      _
    $region11: #{tpu_custom_call.1} parent=1 // pred_check_branch
      %39 = sbr.rel (0) target = $region13
    $region12: #{tpu_custom_call.1} parent=1 // pred_region
      _
    $region13: #{tpu_custom_call.1} parent=1 // pred_fallthru
      _
    // Predicated region
    $region14: #{tpu_custom_call.1} parent=1 // pred_check
      _
    $region15: #{tpu_custom_call.1} parent=1 // pred_check_branch
      %41 = sbr.rel (0) target = $region17
    $region16: #{tpu_custom_call.1} parent=1 // pred_region
      _
    $region17: #{tpu_custom_call.1} parent=1 // pred_fallthru
      _
    // Predicated region
    $region18: #{tpu_custom_call.1} parent=1 // pred_check
      _
    $region19: #{tpu_custom_call.1} parent=1 // pred_check_branch
      %43 = sbr.rel (0) target = $region21
    $region20: #{tpu_custom_call.1} parent=1 // pred_region
      _
    $region21: #{tpu_custom_call.1} parent=1 // pred_fallthru
      _
    // Predicated region
    $region22: #{tpu_custom_call.1} parent=1 // pred_check
      _
    $region23: #{tpu_custom_call.1} parent=1 // pred_check_branch
      %45 = sbr.rel (0) target = $region25
    $region24: #{tpu_custom_call.1} parent=1 // pred_region
      %46 = dma.done [#allocation5], 3072
    $region25: #{tpu_custom_call.1} parent=1 // pred_fallthru
      _
    // Predicated region
    $region26: #{tpu_custom_call.1} parent=1 // pred_check
      _
    $region27: #{tpu_custom_call.1} parent=1 // pred_check_branch
      %48 = sbr.rel (0) target = $region29
    $region28: #{tpu_custom_call.1} parent=1 // pred_region
      %49 = dma.done [#allocation7], 6144
    $region29: #{tpu_custom_call.1} parent=1 // pred_fallthru
      _
    %p50 = scmp.eq.s32.totalorder 0, 0
    // Predicated region
    $region30: #{tpu_custom_call.1} parent=1 // pred_check
      %p51 = pneg %p50
    $region31: #{tpu_custom_call.1} parent=1 // pred_check_branch
      %53 = sbr.rel (%p51) target = $region33
    $region32: #{tpu_custom_call.1} parent=1 // pred_region
      %54 = vst [vmem:[#allocation2] sm:$0xff] 0.0
    $region33: #{tpu_custom_call.1} parent=1 // pred_fallthru
      _
    %v55 = vld [vmem:[#allocation6] sm:$0xff]
    %v56 = vld [vmem:[#allocation6 + $0x8] sm:$0xff]
    %v57 = vld [vmem:[#allocation6 + $0x10] sm:$0xff]
    %v58 = vld [vmem:[#allocation6 + $0x18] sm:$0xff]
    %v59 = vld [vmem:[#allocation6 + $0x20] sm:$0xff]
    %v60 = vld [vmem:[#allocation6 + $0x28] sm:$0xff]
    %v61 = vld [vmem:[#allocation6 + $0x30] sm:$0xff]
    %v62 = vld [vmem:[#allocation6 + $0x38] sm:$0xff]
    %v63 = vld [vmem:[#allocation6 + $0x40] sm:$0xff]
    %v64 = vld [vmem:[#allocation6 + $0x48] sm:$0xff]
    %v65 = vld [vmem:[#allocation6 + $0x50] sm:$0xff]
    %v66 = vld [vmem:[#allocation6 + $0x58] sm:$0xff]
    %v67 = vld [vmem:[#allocation6 + $0x60] sm:$0xff]
    %v68 = vld [vmem:[#allocation6 + $0x68] sm:$0xff]
    %v69 = vld [vmem:[#allocation6 + $0x70] sm:$0xff]
    %v70 = vld [vmem:[#allocation6 + $0x78] sm:$0xff]
    %v71 = vld [vmem:[#allocation6 + $0x80] sm:$0xff]
    %v72 = vld [vmem:[#allocation6 + $0x88] sm:$0xff]
    %v73 = vld [vmem:[#allocation6 + $0x90] sm:$0xff]
    %v74 = vld [vmem:[#allocation6 + $0x98] sm:$0xff]
    %v75 = vld [vmem:[#allocation6 + $0xa0] sm:$0xff]
    %v76 = vld [vmem:[#allocation6 + $0xa8] sm:$0xff]
    %v77 = vld [vmem:[#allocation6 + $0xb0] sm:$0xff]
    %v78 = vld [vmem:[#allocation6 + $0xb8] sm:$0xff]
    %v79 = vld [vmem:[#allocation6 + $0xc0] sm:$0xff]
    %v80 = vld [vmem:[#allocation6 + $0xc8] sm:$0xff]
    %v81 = vld [vmem:[#allocation6 + $0xd0] sm:$0xff]
    %v82 = vld [vmem:[#allocation6 + $0xd8] sm:$0xff]
    %v83 = vld [vmem:[#allocation6 + $0xe0] sm:$0xff]
    %v84 = vld [vmem:[#allocation6 + $0xe8] sm:$0xff]
    %v85 = vld [vmem:[#allocation6 + $0xf0] sm:$0xff]
    %v86 = vld [vmem:[#allocation6 + $0xf8] sm:$0xff]
    %v87 = vld [vmem:[#allocation6 + $0x100] sm:$0xff]
    %v88 = vld [vmem:[#allocation6 + $0x108] sm:$0xff]
    %v89 = vld [vmem:[#allocation6 + $0x110] sm:$0xff]
    %v90 = vld [vmem:[#allocation6 + $0x118] sm:$0xff]
    %v91 = vld [vmem:[#allocation6 + $0x120] sm:$0xff]
    %v92 = vld [vmem:[#allocation6 + $0x128] sm:$0xff]
    %v93 = vld [vmem:[#allocation6 + $0x130] sm:$0xff]
    %v94 = vld [vmem:[#allocation6 + $0x138] sm:$0xff]
    %v95 = vld [vmem:[#allocation6 + $0x140] sm:$0xff]
    %v96 = vld [vmem:[#allocation6 + $0x148] sm:$0xff]
    %v97 = vld [vmem:[#allocation6 + $0x150] sm:$0xff]
    %v98 = vld [vmem:[#allocation6 + $0x158] sm:$0xff]
    %v99 = vld [vmem:[#allocation6 + $0x160] sm:$0xff]
    %v100 = vld [vmem:[#allocation6 + $0x168] sm:$0xff]
    %v101 = vld [vmem:[#allocation6 + $0x170] sm:$0xff]
    %v102 = vld [vmem:[#allocation6 + $0x178] sm:$0xff]
    %v103 = vld [vmem:[%s2] sm:$0x1]
    %v105 = vlaneseq
    %v106 = vshrl.u32 %v105, 7
    %v107 = vsub.s32 0, %v106
    %v108 = vrot.slane %v103, %v107
    %v110 = vld [vmem:[#allocation2] sm:$0xff]
    %v111 = vld [vmem:[#allocation4] sm:$0xff]
    %v112 = vld [vmem:[#allocation4 + $0x8] sm:$0xff]
    %v113 = vld [vmem:[#allocation4 + $0x10] sm:$0xff]
    %114 = vmatprep.subr.mxu0 %v56
    %115 = vmatpush1.msra.mxu0 %v55
    %116 = vmatprep.subr.mxu0 %v59
    %117 = vmatpush1.msra.mxu0 %v58
    %118 = vmatprep.subr.mxu0 %v62
    %119 = vmatpush1.msra.mxu0 %v61
    %120 = vmatprep.subr.mxu0 %v65
    %121 = vmatpush1.msra.mxu0 %v64
    %122 = vmatprep.subr.mxu0 %v68
    %123 = vmatpush1.msra.mxu0 %v67
    %124 = vmatprep.subr.mxu0 %v71
    %125 = vmatpush1.msra.mxu0 %v70
    %126 = vmatprep.subr.mxu0 %v74
    %127 = vmatpush1.msra.mxu0 %v73
    %128 = vmatprep.subr.mxu0 %v77
    %129 = vmatpush1.msra.mxu0 %v76
    %130 = vmatprep.subr.mxu0 %v80
    %131 = vmatpush1.msra.mxu0 %v79
    %132 = vmatprep.subr.mxu0 %v83
    %133 = vmatpush1.msra.mxu0 %v82
    %134 = vmatprep.subr.mxu0 %v86
    %135 = vmatpush1.msra.mxu0 %v85
    %136 = vmatprep.subr.mxu0 %v89
    %137 = vmatpush1.msra.mxu0 %v88
    %138 = vmatprep.subr.mxu0 %v92
    %139 = vmatpush1.msra.mxu0 %v91
    %140 = vmatprep.subr.mxu0 %v95
    %141 = vmatpush1.msra.mxu0 %v94
    %142 = vmatprep.subr.mxu0 %v98
    %143 = vmatpush1.msra.mxu0 %v97
    %144 = vmatprep.subr.mxu0 %v101
    %145 = vmatpush1.msra.mxu0 %v100
    %146 = vmatprep.subr.mxu0 0.0
    %147 = vmatpush1.msra.mxu0 0.0
    %148 = vmatprep.subr.mxu0 0.0
    %149 = vmatpush1.msra.mxu0 0.0
    %150 = vmatprep.subr.mxu0 0.0
    %151 = vmatpush1.msra.mxu0 0.0
    %152 = vmatprep.subr.mxu0 0.0
    %153 = vmatpush1.msra.mxu0 0.0
    %154 = vmatprep.subr.mxu0 0.0
    %155 = vmatpush1.msra.mxu0 0.0
    %156 = vmatprep.subr.mxu0 0.0
    %157 = vmatpush1.msra.mxu0 0.0
    %158 = vmatprep.subr.mxu0 0.0
    %159 = vmatpush1.msra.mxu0 0.0
    %160 = vmatprep.subr.mxu0 0.0
    %161 = vmatpush1.msra.mxu0 0.0
    %162 = vmatprep.subr.mxu0 0.0
    %163 = vmatpush1.msra.mxu0 0.0
    %164 = vmatprep.subr.mxu0 0.0
    %165 = vmatpush1.msra.mxu0 0.0
    %166 = vmatprep.subr.mxu0 0.0
    %167 = vmatpush1.msra.mxu0 0.0
    %168 = vmatprep.subr.mxu0 0.0
    %169 = vmatpush1.msra.mxu0 0.0
    %170 = vmatprep.subr.mxu0 0.0
    %171 = vmatpush1.msra.mxu0 0.0
    %172 = vmatprep.subr.mxu0 0.0
    %173 = vmatpush1.msra.mxu0 0.0
    %174 = vmatprep.subr.mxu0 0.0
    %175 = vmatpush1.msra.mxu0 0.0
    %176 = vmatprep.subr.mxu0 0.0
    %177 = vmatpush1.msra.mxu0 0.0
    %178 = vmatprep.mubr.f32.mxu0 0.0
    %179 = vmatmul.mubr.f32.gmra.mrb[0].mxu0 %v110
    %v180 = vpop.f32.mrb[0].mxu0
    %v181 = vadd.f32 0.0, %v180
    %v182 = vpop.f32.mrb[0].mxu0
    %v183 = vadd.f32 0.0, %v182
    %184 = vdwg.mxu0
    %185 = vmatprep.subr.mxu0 0.0
    %186 = vmatpush1.msra.mxu0 %v57
    %187 = vmatprep.subr.mxu0 0.0
    %188 = vmatpush1.msra.mxu0 %v60
    %189 = vmatprep.subr.mxu0 0.0
    %190 = vmatpush1.msra.mxu0 %v63
    %191 = vmatprep.subr.mxu0 0.0
    %192 = vmatpush1.msra.mxu0 %v66
    %193 = vmatprep.subr.mxu0 0.0
    %194 = vmatpush1.msra.mxu0 %v69
    %195 = vmatprep.subr.mxu0 0.0
    %196 = vmatpush1.msra.mxu0 %v72
    %197 = vmatprep.subr.mxu0 0.0
    %198 = vmatpush1.msra.mxu0 %v75
    %199 = vmatprep.subr.mxu0 0.0
    %200 = vmatpush1.msra.mxu0 %v78
    %201 = vmatprep.subr.mxu0 0.0
    %202 = vmatpush1.msra.mxu0 %v81
    %203 = vmatprep.subr.mxu0 0.0
    %204 = vmatpush1.msra.mxu0 %v84
    %205 = vmatprep.subr.mxu0 0.0
    %206 = vmatpush1.msra.mxu0 %v87
    %207 = vmatprep.subr.mxu0 0.0
    %208 = vmatpush1.msra.mxu0 %v90
    %209 = vmatprep.subr.mxu0 0.0
    %210 = vmatpush1.msra.mxu0 %v93
    %211 = vmatprep.subr.mxu0 0.0
    %212 = vmatpush1.msra.mxu0 %v96
    %213 = vmatprep.subr.mxu0 0.0
    %214 = vmatpush1.msra.mxu0 %v99
    %215 = vmatprep.subr.mxu0 0.0
    %216 = vmatpush1.msra.mxu0 %v102
    %217 = vmatprep.subr.mxu0 0.0
    %218 = vmatpush1.msra.mxu0 0.0
    %219 = vmatprep.subr.mxu0 0.0
    %220 = vmatpush1.msra.mxu0 0.0
    %221 = vmatprep.subr.mxu0 0.0
    %222 = vmatpush1.msra.mxu0 0.0
    %223 = vmatprep.subr.mxu0 0.0
    %224 = vmatpush1.msra.mxu0 0.0
    %225 = vmatprep.subr.mxu0 0.0
    %226 = vmatpush1.msra.mxu0 0.0
    %227 = vmatprep.subr.mxu0 0.0
    %228 = vmatpush1.msra.mxu0 0.0
    %229 = vmatprep.subr.mxu0 0.0
    %230 = vmatpush1.msra.mxu0 0.0
    %231 = vmatprep.subr.mxu0 0.0
    %232 = vmatpush1.msra.mxu0 0.0
    %233 = vmatprep.subr.mxu0 0.0
    %234 = vmatpush1.msra.mxu0 0.0
    %235 = vmatprep.subr.mxu0 0.0
    %236 = vmatpush1.msra.mxu0 0.0
    %237 = vmatprep.subr.mxu0 0.0
    %238 = vmatpush1.msra.mxu0 0.0
    %239 = vmatprep.subr.mxu0 0.0
    %240 = vmatpush1.msra.mxu0 0.0
    %241 = vmatprep.subr.mxu0 0.0
    %242 = vmatpush1.msra.mxu0 0.0
    %243 = vmatprep.subr.mxu0 0.0
    %244 = vmatpush1.msra.mxu0 0.0
    %245 = vmatprep.subr.mxu0 0.0
    %246 = vmatpush1.msra.mxu0 0.0
    %247 = vmatprep.subr.mxu0 0.0
    %248 = vmatpush1.msra.mxu0 0.0
    %249 = vmatprep.mubr.f32.mxu0 0.0
    %250 = vmatmul.mubr.f32.gmra.mrb[0].mxu0 %v110
    %v251 = vpop.f32.mrb[0].mxu0
    %v252 = vadd.f32 0.0, %v251
    %v253 = vpop.f32.mrb[0].mxu0
    %254 = vdwg.mxu0
    %v255 = vadd.f32 %v111, %v181
    %v256 = vadd.f32 %v112, %v183
    %v257 = vxor.u32 %v255, 2147483648
    %v258 = vxor.u32 %v256, 2147483648
    %v259 = vmul.f32 %v257, 1.442695
    %v260 = vpow.pop %v259
    %v261 = vmul.f32 %v258, 1.442695
    %v262 = vpow.pop %v261
    %v263 = vadd.f32 %v260, 1.0
    %v264 = vadd.f32 %v262, 1.0
    %v265 = vrcp.pop %v263
    %v266 = vmul.f32 1.0, %v265
    %v267 = vrcp.pop %v264
    %v268 = vmul.f32 1.0, %v267
    %v269 = vadd.f32 %v252, %v108
    %v270 = vmul.f32 %v266, %v269
    %v271 = vadd.f32 %v113, %v270
    %v272 = vtanh.pop %v271
    %v273 = vsub.f32 1.0, %v268
    %v274 = vmul.f32 %v273, %v272
    %v275 = vmul.f32 %v268, %v110
    %v276 = vadd.f32 %v274, %v275
    %s277 = scalar_lea.vmem [#allocation4], 24
    %v278 = vld [vmem:[%s277] sm:$0xff]
    %v279 = vld [vmem:[%s277 + $0x8] sm:$0xff]
    %v280 = vld [vmem:[%s277 + $0x10] sm:$0xff]
    %281 = vmatprep.subr.mxu0 %v56
    %282 = vmatpush1.msra.mxu0 %v55
    %283 = vmatprep.subr.mxu0 %v59
    %284 = vmatpush1.msra.mxu0 %v58
    %285 = vmatprep.subr.mxu0 %v62
    %286 = vmatpush1.msra.mxu0 %v61
    %287 = vmatprep.subr.mxu0 %v65
    %288 = vmatpush1.msra.mxu0 %v64
    %289 = vmatprep.subr.mxu0 %v68
    %290 = vmatpush1.msra.mxu0 %v67
    %291 = vmatprep.subr.mxu0 %v71
    %292 = vmatpush1.msra.mxu0 %v70
    %293 = vmatprep.subr.mxu0 %v74
    %294 = vmatpush1.msra.mxu0 %v73
    %295 = vmatprep.subr.mxu0 %v77
    %296 = vmatpush1.msra.mxu0 %v76
    %297 = vmatprep.subr.mxu0 %v80
    %298 = vmatpush1.msra.mxu0 %v79
    %299 = vmatprep.subr.mxu0 %v83
    %300 = vmatpush1.msra.mxu0 %v82
    %301 = vmatprep.subr.mxu0 %v86
    %302 = vmatpush1.msra.mxu0 %v85
    %303 = vmatprep.subr.mxu0 %v89
    %304 = vmatpush1.msra.mxu0 %v88
    %305 = vmatprep.subr.mxu0 %v92
    %306 = vmatpush1.msra.mxu0 %v91
    %307 = vmatprep.subr.mxu0 %v95
    %308 = vmatpush1.msra.mxu0 %v94
    %309 = vmatprep.subr.mxu0 %v98
    %310 = vmatpush1.msra.mxu0 %v97
    %311 = vmatprep.subr.mxu0 %v101
    %312 = vmatpush1.msra.mxu0 %v100
    %313 = vmatprep.subr.mxu0 0.0
    %314 = vmatpush1.msra.mxu0 0.0
    %315 = vmatprep.subr.mxu0 0.0
    %316 = vmatpush1.msra.mxu0 0.0
    %317 = vmatprep.subr.mxu0 0.0
    %318 = vmatpush1.msra.mxu0 0.0
    %319 = vmatprep.subr.mxu0 0.0
    %320 = vmatpush1.msra.mxu0 0.0
    %321 = vmatprep.subr.mxu0 0.0
    %322 = vmatpush1.msra.mxu0 0.0
    %323 = vmatprep.subr.mxu0 0.0
    %324 = vmatpush1.msra.mxu0 0.0
    %325 = vmatprep.subr.mxu0 0.0
    %326 = vmatpush1.msra.mxu0 0.0
    %327 = vmatprep.subr.mxu0 0.0
    %328 = vmatpush1.msra.mxu0 0.0
    %329 = vmatprep.subr.mxu0 0.0
    %330 = vmatpush1.msra.mxu0 0.0
    %331 = vmatprep.subr.mxu0 0.0
    %332 = vmatpush1.msra.mxu0 0.0
    %333 = vmatprep.subr.mxu0 0.0
    %334 = vmatpush1.msra.mxu0 0.0
    %335 = vmatprep.subr.mxu0 0.0
    %336 = vmatpush1.msra.mxu0 0.0
    %337 = vmatprep.subr.mxu0 0.0
    %338 = vmatpush1.msra.mxu0 0.0
    %339 = vmatprep.subr.mxu0 0.0
    %340 = vmatpush1.msra.mxu0 0.0
    %341 = vmatprep.subr.mxu0 0.0
    %342 = vmatpush1.msra.mxu0 0.0
    %343 = vmatprep.subr.mxu0 0.0
    %344 = vmatpush1.msra.mxu0 0.0
    %345 = vmatprep.mubr.f32.mxu0 0.0
    %346 = vmatmul.mubr.f32.gmra.mrb[0].mxu0 %v276
    %v347 = vpop.f32.mrb[0].mxu0
    %v348 = vadd.f32 0.0, %v347
    %v349 = vpop.f32.mrb[0].mxu0
    %v350 = vadd.f32 0.0, %v349
    %351 = vdwg.mxu0
    %352 = vmatprep.subr.mxu0 0.0
    %353 = vmatpush1.msra.mxu0 %v57
    %354 = vmatprep.subr.mxu0 0.0
    %355 = vmatpush1.msra.mxu0 %v60
    %356 = vmatprep.subr.mxu0 0.0
    %357 = vmatpush1.msra.mxu0 %v63
    %358 = vmatprep.subr.mxu0 0.0
    %359 = vmatpush1.msra.mxu0 %v66
    %360 = vmatprep.subr.mxu0 0.0
    %361 = vmatpush1.msra.mxu0 %v69
    %362 = vmatprep.subr.mxu0 0.0
    %363 = vmatpush1.msra.mxu0 %v72
    %364 = vmatprep.subr.mxu0 0.0
    %365 = vmatpush1.msra.mxu0 %v75
    %366 = vmatprep.subr.mxu0 0.0
    %367 = vmatpush1.msra.mxu0 %v78
    %368 = vmatprep.subr.mxu0 0.0
    %369 = vmatpush1.msra.mxu0 %v81
    %370 = vmatprep.subr.mxu0 0.0
    %371 = vmatpush1.msra.mxu0 %v84
    %372 = vmatprep.subr.mxu0 0.0
    %373 = vmatpush1.msra.mxu0 %v87
    %374 = vmatprep.subr.mxu0 0.0
    %375 = vmatpush1.msra.mxu0 %v90
    %376 = vmatprep.subr.mxu0 0.0
    %377 = vmatpush1.msra.mxu0 %v93
    %378 = vmatprep.subr.mxu0 0.0
    %379 = vmatpush1.msra.mxu0 %v96
    %380 = vmatprep.subr.mxu0 0.0
    %381 = vmatpush1.msra.mxu0 %v99
    %382 = vmatprep.subr.mxu0 0.0
    %383 = vmatpush1.msra.mxu0 %v102
    %384 = vmatprep.subr.mxu0 0.0
    %385 = vmatpush1.msra.mxu0 0.0
    %386 = vmatprep.subr.mxu0 0.0
    %387 = vmatpush1.msra.mxu0 0.0
    %388 = vmatprep.subr.mxu0 0.0
    %389 = vmatpush1.msra.mxu0 0.0
    %390 = vmatprep.subr.mxu0 0.0
    %391 = vmatpush1.msra.mxu0 0.0
    %392 = vmatprep.subr.mxu0 0.0
    %393 = vmatpush1.msra.mxu0 0.0
    %394 = vmatprep.subr.mxu0 0.0
    %395 = vmatpush1.msra.mxu0 0.0
    %396 = vmatprep.subr.mxu0 0.0
    %397 = vmatpush1.msra.mxu0 0.0
    %398 = vmatprep.subr.mxu0 0.0
    %399 = vmatpush1.msra.mxu0 0.0
    %400 = vmatprep.subr.mxu0 0.0
    %401 = vmatpush1.msra.mxu0 0.0
    %402 = vmatprep.subr.mxu0 0.0
    %403 = vmatpush1.msra.mxu0 0.0
    %404 = vmatprep.subr.mxu0 0.0
    %405 = vmatpush1.msra.mxu0 0.0
    %406 = vmatprep.subr.mxu0 0.0
    %407 = vmatpush1.msra.mxu0 0.0
    %408 = vmatprep.subr.mxu0 0.0
    %409 = vmatpush1.msra.mxu0 0.0
    %410 = vmatprep.subr.mxu0 0.0
    %411 = vmatpush1.msra.mxu0 0.0
    %412 = vmatprep.subr.mxu0 0.0
    %413 = vmatpush1.msra.mxu0 0.0
    %414 = vmatprep.subr.mxu0 0.0
    %415 = vmatpush1.msra.mxu0 0.0
    %416 = vmatprep.mubr.f32.mxu0 0.0
    %417 = vmatmul.mubr.f32.gmra.mrb[0].mxu0 %v276
    %v418 = vpop.f32.mrb[0].mxu0
    %v419 = vadd.f32 0.0, %v418
    %v420 = vpop.f32.mrb[0].mxu0
    %421 = vdwg.mxu0
    %v422 = vadd.f32 %v278, %v348
    %v423 = vadd.f32 %v279, %v350
    %v424 = vxor.u32 %v422, 2147483648
    %v425 = vxor.u32 %v423, 2147483648
    %v426 = vmul.f32 %v424, 1.442695
    %v427 = vpow.pop %v426
    %v428 = vmul.f32 %v425, 1.442695
    %v429 = vpow.pop %v428
    %v430 = vadd.f32 %v427, 1.0
    %v431 = vadd.f32 %v429, 1.0
    %v432 = vrcp.pop %v430
    %v433 = vmul.f32 1.0, %v432
    %v434 = vrcp.pop %v431
    %v435 = vmul.f32 1.0, %v434
    %v436 = vadd.f32 %v419, %v108
    %v437 = vmul.f32 %v433, %v436
    %v438 = vadd.f32 %v280, %v437
    %v439 = vtanh.pop %v438
    %v440 = vsub.f32 1.0, %v435
    %v441 = vmul.f32 %v440, %v439
    %v442 = vmul.f32 %v435, %v276
    %v443 = vadd.f32 %v441, %v442
    %s444 = scalar_lea.vmem [#allocation4], 48
    %v445 = vld [vmem:[%s444] sm:$0xff]
    %v446 = vld [vmem:[%s444 + $0x8] sm:$0xff]
    %v447 = vld [vmem:[%s444 + $0x10] sm:$0xff]
    %448 = vmatprep.subr.mxu0 %v56
    %449 = vmatpush1.msra.mxu0 %v55
    %450 = vmatprep.subr.mxu0 %v59
    %451 = vmatpush1.msra.mxu0 %v58
    %452 = vmatprep.subr.mxu0 %v62
    %453 = vmatpush1.msra.mxu0 %v61
    %454 = vmatprep.subr.mxu0 %v65
    %455 = vmatpush1.msra.mxu0 %v64
    %456 = vmatprep.subr.mxu0 %v68
    %457 = vmatpush1.msra.mxu0 %v67
    %458 = vmatprep.subr.mxu0 %v71
    %459 = vmatpush1.msra.mxu0 %v70
    %460 = vmatprep.subr.mxu0 %v74
    %461 = vmatpush1.msra.mxu0 %v73
    %462 = vmatprep.subr.mxu0 %v77
    %463 = vmatpush1.msra.mxu0 %v76
    %464 = vmatprep.subr.mxu0 %v80
    %465 = vmatpush1.msra.mxu0 %v79
    %466 = vmatprep.subr.mxu0 %v83
    %467 = vmatpush1.msra.mxu0 %v82
    %468 = vmatprep.subr.mxu0 %v86
    %469 = vmatpush1.msra.mxu0 %v85
    %470 = vmatprep.subr.mxu0 %v89
    %471 = vmatpush1.msra.mxu0 %v88
    %472 = vmatprep.subr.mxu0 %v92
    %473 = vmatpush1.msra.mxu0 %v91
    %474 = vmatprep.subr.mxu0 %v95
    %475 = vmatpush1.msra.mxu0 %v94
    %476 = vmatprep.subr.mxu0 %v98
    %477 = vmatpush1.msra.mxu0 %v97
    %478 = vmatprep.subr.mxu0 %v101
    %479 = vmatpush1.msra.mxu0 %v100
    %480 = vmatprep.subr.mxu0 0.0
    %481 = vmatpush1.msra.mxu0 0.0
    %482 = vmatprep.subr.mxu0 0.0
    %483 = vmatpush1.msra.mxu0 0.0
    %484 = vmatprep.subr.mxu0 0.0
    %485 = vmatpush1.msra.mxu0 0.0
    %486 = vmatprep.subr.mxu0 0.0
    %487 = vmatpush1.msra.mxu0 0.0
    %488 = vmatprep.subr.mxu0 0.0
    %489 = vmatpush1.msra.mxu0 0.0
    %490 = vmatprep.subr.mxu0 0.0
    %491 = vmatpush1.msra.mxu0 0.0
    %492 = vmatprep.subr.mxu0 0.0
    %493 = vmatpush1.msra.mxu0 0.0
    %494 = vmatprep.subr.mxu0 0.0
    %495 = vmatpush1.msra.mxu0 0.0
    %496 = vmatprep.subr.mxu0 0.0
    %497 = vmatpush1.msra.mxu0 0.0
    %498 = vmatprep.subr.mxu0 0.0
    %499 = vmatpush1.msra.mxu0 0.0
    %500 = vmatprep.subr.mxu0 0.0
    %501 = vmatpush1.msra.mxu0 0.0
    %502 = vmatprep.subr.mxu0 0.0
    %503 = vmatpush1.msra.mxu0 0.0
    %504 = vmatprep.subr.mxu0 0.0
    %505 = vmatpush1.msra.mxu0 0.0
    %506 = vmatprep.subr.mxu0 0.0
    %507 = vmatpush1.msra.mxu0 0.0
    %508 = vmatprep.subr.mxu0 0.0
    %509 = vmatpush1.msra.mxu0 0.0
    %510 = vmatprep.subr.mxu0 0.0
    %511 = vmatpush1.msra.mxu0 0.0
    %512 = vmatprep.mubr.f32.mxu0 0.0
    %513 = vmatmul.mubr.f32.gmra.mrb[0].mxu0 %v443
    %v514 = vpop.f32.mrb[0].mxu0
    %v515 = vadd.f32 0.0, %v514
    %v516 = vpop.f32.mrb[0].mxu0
    %v517 = vadd.f32 0.0, %v516
    %518 = vdwg.mxu0
    %519 = vmatprep.subr.mxu0 0.0
    %520 = vmatpush1.msra.mxu0 %v57
    %521 = vmatprep.subr.mxu0 0.0
    %522 = vmatpush1.msra.mxu0 %v60
    %523 = vmatprep.subr.mxu0 0.0
    %524 = vmatpush1.msra.mxu0 %v63
    %525 = vmatprep.subr.mxu0 0.0
    %526 = vmatpush1.msra.mxu0 %v66
    %527 = vmatprep.subr.mxu0 0.0
    %528 = vmatpush1.msra.mxu0 %v69
    %529 = vmatprep.subr.mxu0 0.0
    %530 = vmatpush1.msra.mxu0 %v72
    %531 = vmatprep.subr.mxu0 0.0
    %532 = vmatpush1.msra.mxu0 %v75
    %533 = vmatprep.subr.mxu0 0.0
    %534 = vmatpush1.msra.mxu0 %v78
    %535 = vmatprep.subr.mxu0 0.0
    %536 = vmatpush1.msra.mxu0 %v81
    %537 = vmatprep.subr.mxu0 0.0
    %538 = vmatpush1.msra.mxu0 %v84
    %539 = vmatprep.subr.mxu0 0.0
    %540 = vmatpush1.msra.mxu0 %v87
    %541 = vmatprep.subr.mxu0 0.0
    %542 = vmatpush1.msra.mxu0 %v90
    %543 = vmatprep.subr.mxu0 0.0
    %544 = vmatpush1.msra.mxu0 %v93
    %545 = vmatprep.subr.mxu0 0.0
    %546 = vmatpush1.msra.mxu0 %v96
    %547 = vmatprep.subr.mxu0 0.0
    %548 = vmatpush1.msra.mxu0 %v99
    %549 = vmatprep.subr.mxu0 0.0
    %550 = vmatpush1.msra.mxu0 %v102
    %551 = vmatprep.subr.mxu0 0.0
    %552 = vmatpush1.msra.mxu0 0.0
    %553 = vmatprep.subr.mxu0 0.0
    %554 = vmatpush1.msra.mxu0 0.0
    %555 = vmatprep.subr.mxu0 0.0
    %556 = vmatpush1.msra.mxu0 0.0
    %557 = vmatprep.subr.mxu0 0.0
    %558 = vmatpush1.msra.mxu0 0.0
    %559 = vmatprep.subr.mxu0 0.0
    %560 = vmatpush1.msra.mxu0 0.0
    %561 = vmatprep.subr.mxu0 0.0
    %562 = vmatpush1.msra.mxu0 0.0
    %563 = vmatprep.subr.mxu0 0.0
    %564 = vmatpush1.msra.mxu0 0.0
    %565 = vmatprep.subr.mxu0 0.0
    %566 = vmatpush1.msra.mxu0 0.0
    %567 = vmatprep.subr.mxu0 0.0
    %568 = vmatpush1.msra.mxu0 0.0
    %569 = vmatprep.subr.mxu0 0.0
    %570 = vmatpush1.msra.mxu0 0.0
    %571 = vmatprep.subr.mxu0 0.0
    %572 = vmatpush1.msra.mxu0 0.0
    %573 = vmatprep.subr.mxu0 0.0
    %574 = vmatpush1.msra.mxu0 0.0
    %575 = vmatprep.subr.mxu0 0.0
    %576 = vmatpush1.msra.mxu0 0.0
    %577 = vmatprep.subr.mxu0 0.0
    %578 = vmatpush1.msra.mxu0 0.0
    %579 = vmatprep.subr.mxu0 0.0
    %580 = vmatpush1.msra.mxu0 0.0
    %581 = vmatprep.subr.mxu0 0.0
    %582 = vmatpush1.msra.mxu0 0.0
    %583 = vmatprep.mubr.f32.mxu0 0.0
    %584 = vmatmul.mubr.f32.gmra.mrb[0].mxu0 %v443
    %v585 = vpop.f32.mrb[0].mxu0
    %v586 = vadd.f32 0.0, %v585
    %v587 = vpop.f32.mrb[0].mxu0
    %588 = vdwg.mxu0
    %v589 = vadd.f32 %v445, %v515
    %v590 = vadd.f32 %v446, %v517
    %v591 = vxor.u32 %v589, 2147483648
    %v592 = vxor.u32 %v590, 2147483648
    %v593 = vmul.f32 %v591, 1.442695
    %v594 = vpow.pop %v593
    %v595 = vmul.f32 %v592, 1.442695
    %v596 = vpow.pop %v595
    %v597 = vadd.f32 %v594, 1.0
    %v598 = vadd.f32 %v596, 1.0
    %v599 = vrcp.pop %v597
    %v600 = vmul.f32 1.0, %v599
    %v601 = vrcp.pop %v598
    %v602 = vmul.f32 1.0, %v601
    %v603 = vadd.f32 %v586, %v108
    %v604 = vmul.f32 %v600, %v603
    %v605 = vadd.f32 %v447, %v604
    %v606 = vtanh.pop %v605
    %v607 = vsub.f32 1.0, %v602
    %v608 = vmul.f32 %v607, %v606
    %v609 = vmul.f32 %v602, %v443
    %v610 = vadd.f32 %v608, %v609
    %s611 = scalar_lea.vmem [#allocation4], 72
    %v612 = vld [vmem:[%s611] sm:$0xff]
    %v613 = vld [vmem:[%s611 + $0x8] sm:$0xff]
    %v614 = vld [vmem:[%s611 + $0x10] sm:$0xff]
    %615 = vmatprep.subr.mxu0 %v56
    %616 = vmatpush1.msra.mxu0 %v55
    %617 = vmatprep.subr.mxu0 %v59
    %618 = vmatpush1.msra.mxu0 %v58
    %619 = vmatprep.subr.mxu0 %v62
    %620 = vmatpush1.msra.mxu0 %v61
    %621 = vmatprep.subr.mxu0 %v65
    %622 = vmatpush1.msra.mxu0 %v64
    %623 = vmatprep.subr.mxu0 %v68
    %624 = vmatpush1.msra.mxu0 %v67
    %625 = vmatprep.subr.mxu0 %v71
    %626 = vmatpush1.msra.mxu0 %v70
    %627 = vmatprep.subr.mxu0 %v74
    %628 = vmatpush1.msra.mxu0 %v73
    %629 = vmatprep.subr.mxu0 %v77
    %630 = vmatpush1.msra.mxu0 %v76
    %631 = vmatprep.subr.mxu0 %v80
    %632 = vmatpush1.msra.mxu0 %v79
    %633 = vmatprep.subr.mxu0 %v83
    %634 = vmatpush1.msra.mxu0 %v82
    %635 = vmatprep.subr.mxu0 %v86
    %636 = vmatpush1.msra.mxu0 %v85
    %637 = vmatprep.subr.mxu0 %v89
    %638 = vmatpush1.msra.mxu0 %v88
    %639 = vmatprep.subr.mxu0 %v92
    %640 = vmatpush1.msra.mxu0 %v91
    %641 = vmatprep.subr.mxu0 %v95
    %642 = vmatpush1.msra.mxu0 %v94
    %643 = vmatprep.subr.mxu0 %v98
    %644 = vmatpush1.msra.mxu0 %v97
    %645 = vmatprep.subr.mxu0 %v101
    %646 = vmatpush1.msra.mxu0 %v100
    %647 = vmatprep.subr.mxu0 0.0
    %648 = vmatpush1.msra.mxu0 0.0
    %649 = vmatprep.subr.mxu0 0.0
    %650 = vmatpush1.msra.mxu0 0.0
    %651 = vmatprep.subr.mxu0 0.0
    %652 = vmatpush1.msra.mxu0 0.0
    %653 = vmatprep.subr.mxu0 0.0
    %654 = vmatpush1.msra.mxu0 0.0
    %655 = vmatprep.subr.mxu0 0.0
    %656 = vmatpush1.msra.mxu0 0.0
    %657 = vmatprep.subr.mxu0 0.0
    %658 = vmatpush1.msra.mxu0 0.0
    %659 = vmatprep.subr.mxu0 0.0
    %660 = vmatpush1.msra.mxu0 0.0
    %661 = vmatprep.subr.mxu0 0.0
    %662 = vmatpush1.msra.mxu0 0.0
    %663 = vmatprep.subr.mxu0 0.0
    %664 = vmatpush1.msra.mxu0 0.0
    %665 = vmatprep.subr.mxu0 0.0
    %666 = vmatpush1.msra.mxu0 0.0
    %667 = vmatprep.subr.mxu0 0.0
    %668 = vmatpush1.msra.mxu0 0.0
    %669 = vmatprep.subr.mxu0 0.0
    %670 = vmatpush1.msra.mxu0 0.0
    %671 = vmatprep.subr.mxu0 0.0
    %672 = vmatpush1.msra.mxu0 0.0
    %673 = vmatprep.subr.mxu0 0.0
    %674 = vmatpush1.msra.mxu0 0.0
    %675 = vmatprep.subr.mxu0 0.0
    %676 = vmatpush1.msra.mxu0 0.0
    %677 = vmatprep.subr.mxu0 0.0
    %678 = vmatpush1.msra.mxu0 0.0
    %679 = vmatprep.mubr.f32.mxu0 0.0
    %680 = vmatmul.mubr.f32.gmra.mrb[0].mxu0 %v610
    %v681 = vpop.f32.mrb[0].mxu0
    %v682 = vadd.f32 0.0, %v681
    %v683 = vpop.f32.mrb[0].mxu0
    %v684 = vadd.f32 0.0, %v683
    %685 = vdwg.mxu0
    %686 = vmatprep.subr.mxu0 0.0
    %687 = vmatpush1.msra.mxu0 %v57
    %688 = vmatprep.subr.mxu0 0.0
    %689 = vmatpush1.msra.mxu0 %v60
    %690 = vmatprep.subr.mxu0 0.0
    %691 = vmatpush1.msra.mxu0 %v63
    %692 = vmatprep.subr.mxu0 0.0
    %693 = vmatpush1.msra.mxu0 %v66
    %694 = vmatprep.subr.mxu0 0.0
    %695 = vmatpush1.msra.mxu0 %v69
    %696 = vmatprep.subr.mxu0 0.0
    %697 = vmatpush1.msra.mxu0 %v72
    %698 = vmatprep.subr.mxu0 0.0
    %699 = vmatpush1.msra.mxu0 %v75
    %700 = vmatprep.subr.mxu0 0.0
    %701 = vmatpush1.msra.mxu0 %v78
    %702 = vmatprep.subr.mxu0 0.0
    %703 = vmatpush1.msra.mxu0 %v81
    %704 = vmatprep.subr.mxu0 0.0
    %705 = vmatpush1.msra.mxu0 %v84
    %706 = vmatprep.subr.mxu0 0.0
    %707 = vmatpush1.msra.mxu0 %v87
    %708 = vmatprep.subr.mxu0 0.0
    %709 = vmatpush1.msra.mxu0 %v90
    %710 = vmatprep.subr.mxu0 0.0
    %711 = vmatpush1.msra.mxu0 %v93
    %712 = vmatprep.subr.mxu0 0.0
    %713 = vmatpush1.msra.mxu0 %v96
    %714 = vmatprep.subr.mxu0 0.0
    %715 = vmatpush1.msra.mxu0 %v99
    %716 = vmatprep.subr.mxu0 0.0
    %717 = vmatpush1.msra.mxu0 %v102
    %718 = vmatprep.subr.mxu0 0.0
    %719 = vmatpush1.msra.mxu0 0.0
    %720 = vmatprep.subr.mxu0 0.0
    %721 = vmatpush1.msra.mxu0 0.0
    %722 = vmatprep.subr.mxu0 0.0
    %723 = vmatpush1.msra.mxu0 0.0
    %724 = vmatprep.subr.mxu0 0.0
    %725 = vmatpush1.msra.mxu0 0.0
    %726 = vmatprep.subr.mxu0 0.0
    %727 = vmatpush1.msra.mxu0 0.0
    %728 = vmatprep.subr.mxu0 0.0
    %729 = vmatpush1.msra.mxu0 0.0
    %730 = vmatprep.subr.mxu0 0.0
    %731 = vmatpush1.msra.mxu0 0.0
    %732 = vmatprep.subr.mxu0 0.0
    %733 = vmatpush1.msra.mxu0 0.0
    %734 = vmatprep.subr.mxu0 0.0
    %735 = vmatpush1.msra.mxu0 0.0
    %736 = vmatprep.subr.mxu0 0.0
    %737 = vmatpush1.msra.mxu0 0.0
    %738 = vmatprep.subr.mxu0 0.0
    %739 = vmatpush1.msra.mxu0 0.0
    %740 = vmatprep.subr.mxu0 0.0
    %741 = vmatpush1.msra.mxu0 0.0
    %742 = vmatprep.subr.mxu0 0.0
    %743 = vmatpush1.msra.mxu0 0.0
    %744 = vmatprep.subr.mxu0 0.0
    %745 = vmatpush1.msra.mxu0 0.0
    %746 = vmatprep.subr.mxu0 0.0
    %747 = vmatpush1.msra.mxu0 0.0
    %748 = vmatprep.subr.mxu0 0.0
    %749 = vmatpush1.msra.mxu0 0.0
    %750 = vmatprep.mubr.f32.mxu0 0.0
    %751 = vmatmul.mubr.f32.gmra.mrb[0].mxu0 %v610
    %v752 = vpop.f32.mrb[0].mxu0
    %v753 = vadd.f32 0.0, %v752
    %v754 = vpop.f32.mrb[0].mxu0
    %755 = vdwg.mxu0
    %v756 = vadd.f32 %v612, %v682
    %v757 = vadd.f32 %v613, %v684
    %v758 = vxor.u32 %v756, 2147483648
    %v759 = vxor.u32 %v757, 2147483648
    %v760 = vmul.f32 %v758, 1.442695
    %v761 = vpow.pop %v760
    %v762 = vmul.f32 %v759, 1.442695
    %v763 = vpow.pop %v762
    %v764 = vadd.f32 %v761, 1.0
    %v765 = vadd.f32 %v763, 1.0
    %v766 = vrcp.pop %v764
    %v767 = vmul.f32 1.0, %v766
    %v768 = vrcp.pop %v765
    %v769 = vmul.f32 1.0, %v768
    %v770 = vadd.f32 %v753, %v108
    %v771 = vmul.f32 %v767, %v770
    %v772 = vadd.f32 %v614, %v771
    %v773 = vtanh.pop %v772
    %v774 = vsub.f32 1.0, %v769
    %v775 = vmul.f32 %v774, %v773
    %v776 = vmul.f32 %v769, %v610
    %v777 = vadd.f32 %v775, %v776
    %s778 = scalar_lea.vmem [#allocation4], 96
    %v779 = vld [vmem:[%s778] sm:$0xff]
    %v780 = vld [vmem:[%s778 + $0x8] sm:$0xff]
    %v781 = vld [vmem:[%s778 + $0x10] sm:$0xff]
    %782 = vmatprep.subr.mxu0 %v56
    %783 = vmatpush1.msra.mxu0 %v55
    %784 = vmatprep.subr.mxu0 %v59
    %785 = vmatpush1.msra.mxu0 %v58
    %786 = vmatprep.subr.mxu0 %v62
    %787 = vmatpush1.msra.mxu0 %v61
    %788 = vmatprep.subr.mxu0 %v65
    %789 = vmatpush1.msra.mxu0 %v64
    %790 = vmatprep.subr.mxu0 %v68
    %791 = vmatpush1.msra.mxu0 %v67
    %792 = vmatprep.subr.mxu0 %v71
    %793 = vmatpush1.msra.mxu0 %v70
    %794 = vmatprep.subr.mxu0 %v74
    %795 = vmatpush1.msra.mxu0 %v73
    %796 = vmatprep.subr.mxu0 %v77
    %797 = vmatpush1.msra.mxu0 %v76
    %798 = vmatprep.subr.mxu0 %v80
    %799 = vmatpush1.msra.mxu0 %v79
    %800 = vmatprep.subr.mxu0 %v83
    %801 = vmatpush1.msra.mxu0 %v82
    %802 = vmatprep.subr.mxu0 %v86
    %803 = vmatpush1.msra.mxu0 %v85
    %804 = vmatprep.subr.mxu0 %v89
    %805 = vmatpush1.msra.mxu0 %v88
    %806 = vmatprep.subr.mxu0 %v92
    %807 = vmatpush1.msra.mxu0 %v91
    %808 = vmatprep.subr.mxu0 %v95
    %809 = vmatpush1.msra.mxu0 %v94
    %810 = vmatprep.subr.mxu0 %v98
    %811 = vmatpush1.msra.mxu0 %v97
    %812 = vmatprep.subr.mxu0 %v101
    %813 = vmatpush1.msra.mxu0 %v100
    %814 = vmatprep.subr.mxu0 0.0
    %815 = vmatpush1.msra.mxu0 0.0
    %816 = vmatprep.subr.mxu0 0.0
    %817 = vmatpush1.msra.mxu0 0.0
    %818 = vmatprep.subr.mxu0 0.0
    %819 = vmatpush1.msra.mxu0 0.0
    %820 = vmatprep.subr.mxu0 0.0
    %821 = vmatpush1.msra.mxu0 0.0
    %822 = vmatprep.subr.mxu0 0.0
    %823 = vmatpush1.msra.mxu0 0.0
    %824 = vmatprep.subr.mxu0 0.0
    %825 = vmatpush1.msra.mxu0 0.0
    %826 = vmatprep.subr.mxu0 0.0
    %827 = vmatpush1.msra.mxu0 0.0
    %828 = vmatprep.subr.mxu0 0.0
    %829 = vmatpush1.msra.mxu0 0.0
    %830 = vmatprep.subr.mxu0 0.0
    %831 = vmatpush1.msra.mxu0 0.0
    %832 = vmatprep.subr.mxu0 0.0
    %833 = vmatpush1.msra.mxu0 0.0
    %834 = vmatprep.subr.mxu0 0.0
    %835 = vmatpush1.msra.mxu0 0.0
    %836 = vmatprep.subr.mxu0 0.0
    %837 = vmatpush1.msra.mxu0 0.0
    %838 = vmatprep.subr.mxu0 0.0
    %839 = vmatpush1.msra.mxu0 0.0
    %840 = vmatprep.subr.mxu0 0.0
    %841 = vmatpush1.msra.mxu0 0.0
    %842 = vmatprep.subr.mxu0 0.0
    %843 = vmatpush1.msra.mxu0 0.0
    %844 = vmatprep.subr.mxu0 0.0
    %845 = vmatpush1.msra.mxu0 0.0
    %846 = vmatprep.mubr.f32.mxu0 0.0
    %847 = vmatmul.mubr.f32.gmra.mrb[0].mxu0 %v777
    %v848 = vpop.f32.mrb[0].mxu0
    %v849 = vadd.f32 0.0, %v848
    %v850 = vpop.f32.mrb[0].mxu0
    %v851 = vadd.f32 0.0, %v850
    %852 = vdwg.mxu0
    %853 = vmatprep.subr.mxu0 0.0
    %854 = vmatpush1.msra.mxu0 %v57
    %855 = vmatprep.subr.mxu0 0.0
    %856 = vmatpush1.msra.mxu0 %v60
    %857 = vmatprep.subr.mxu0 0.0
    %858 = vmatpush1.msra.mxu0 %v63
    %859 = vmatprep.subr.mxu0 0.0
    %860 = vmatpush1.msra.mxu0 %v66
    %861 = vmatprep.subr.mxu0 0.0
    %862 = vmatpush1.msra.mxu0 %v69
    %863 = vmatprep.subr.mxu0 0.0
    %864 = vmatpush1.msra.mxu0 %v72
    %865 = vmatprep.subr.mxu0 0.0
    %866 = vmatpush1.msra.mxu0 %v75
    %867 = vmatprep.subr.mxu0 0.0
    %868 = vmatpush1.msra.mxu0 %v78
    %869 = vmatprep.subr.mxu0 0.0
    %870 = vmatpush1.msra.mxu0 %v81
    %871 = vmatprep.subr.mxu0 0.0
    %872 = vmatpush1.msra.mxu0 %v84
    %873 = vmatprep.subr.mxu0 0.0
    %874 = vmatpush1.msra.mxu0 %v87
    %875 = vmatprep.subr.mxu0 0.0
    %876 = vmatpush1.msra.mxu0 %v90
    %877 = vmatprep.subr.mxu0 0.0
    %878 = vmatpush1.msra.mxu0 %v93
    %879 = vmatprep.subr.mxu0 0.0
    %880 = vmatpush1.msra.mxu0 %v96
    %881 = vmatprep.subr.mxu0 0.0
    %882 = vmatpush1.msra.mxu0 %v99
    %883 = vmatprep.subr.mxu0 0.0
    %884 = vmatpush1.msra.mxu0 %v102
    %885 = vmatprep.subr.mxu0 0.0
    %886 = vmatpush1.msra.mxu0 0.0
    %887 = vmatprep.subr.mxu0 0.0
    %888 = vmatpush1.msra.mxu0 0.0
    %889 = vmatprep.subr.mxu0 0.0
    %890 = vmatpush1.msra.mxu0 0.0
    %891 = vmatprep.subr.mxu0 0.0
    %892 = vmatpush1.msra.mxu0 0.0
    %893 = vmatprep.subr.mxu0 0.0
    %894 = vmatpush1.msra.mxu0 0.0
    %895 = vmatprep.subr.mxu0 0.0
    %896 = vmatpush1.msra.mxu0 0.0
    %897 = vmatprep.subr.mxu0 0.0
    %898 = vmatpush1.msra.mxu0 0.0
    %899 = vmatprep.subr.mxu0 0.0
    %900 = vmatpush1.msra.mxu0 0.0
    %901 = vmatprep.subr.mxu0 0.0
    %902 = vmatpush1.msra.mxu0 0.0
    %903 = vmatprep.subr.mxu0 0.0
    %904 = vmatpush1.msra.mxu0 0.0
    %905 = vmatprep.subr.mxu0 0.0
    %906 = vmatpush1.msra.mxu0 0.0
    %907 = vmatprep.subr.mxu0 0.0
    %908 = vmatpush1.msra.mxu0 0.0
    %909 = vmatprep.subr.mxu0 0.0
    %910 = vmatpush1.msra.mxu0 0.0
    %911 = vmatprep.subr.mxu0 0.0
    %912 = vmatpush1.msra.mxu0 0.0
    %913 = vmatprep.subr.mxu0 0.0
    %914 = vmatpush1.msra.mxu0 0.0
    %915 = vmatprep.subr.mxu0 0.0
    %916 = vmatpush1.msra.mxu0 0.0
    %917 = vmatprep.mubr.f32.mxu0 0.0
    %918 = vmatmul.mubr.f32.gmra.mrb[0].mxu0 %v777
    %v919 = vpop.f32.mrb[0].mxu0
    %v920 = vadd.f32 0.0, %v919
    %v921 = vpop.f32.mrb[0].mxu0
    %922 = vdwg.mxu0
    %v923 = vadd.f32 %v779, %v849
    %v924 = vadd.f32 %v780, %v851
    %v925 = vxor.u32 %v923, 2147483648
    %v926 = vxor.u32 %v924, 2147483648
    %v927 = vmul.f32 %v925, 1.442695
    %v928 = vpow.pop %v927
    %v929 = vmul.f32 %v926, 1.442695
    %v930 = vpow.pop %v929
    %v931 = vadd.f32 %v928, 1.0
    %v932 = vadd.f32 %v930, 1.0
    %v933 = vrcp.pop %v931
    %v934 = vmul.f32 1.0, %v933
    %v935 = vrcp.pop %v932
    %v936 = vmul.f32 1.0, %v935
    %v937 = vadd.f32 %v920, %v108
    %v938 = vmul.f32 %v934, %v937
    %v939 = vadd.f32 %v781, %v938
    %v940 = vtanh.pop %v939
    %v941 = vsub.f32 1.0, %v936
    %v942 = vmul.f32 %v941, %v940
    %v943 = vmul.f32 %v936, %v777
    %v944 = vadd.f32 %v942, %v943
    %s945 = scalar_lea.vmem [#allocation4], 120
    %v946 = vld [vmem:[%s945] sm:$0xff]
    %v947 = vld [vmem:[%s945 + $0x8] sm:$0xff]
    %v948 = vld [vmem:[%s945 + $0x10] sm:$0xff]
    %949 = vmatprep.subr.mxu0 %v56
    %950 = vmatpush1.msra.mxu0 %v55
    %951 = vmatprep.subr.mxu0 %v59
    %952 = vmatpush1.msra.mxu0 %v58
    %953 = vmatprep.subr.mxu0 %v62
    %954 = vmatpush1.msra.mxu0 %v61
    %955 = vmatprep.subr.mxu0 %v65
    %956 = vmatpush1.msra.mxu0 %v64
    %957 = vmatprep.subr.mxu0 %v68
    %958 = vmatpush1.msra.mxu0 %v67
    %959 = vmatprep.subr.mxu0 %v71
    %960 = vmatpush1.msra.mxu0 %v70
    %961 = vmatprep.subr.mxu0 %v74
    %962 = vmatpush1.msra.mxu0 %v73
    %963 = vmatprep.subr.mxu0 %v77
    %964 = vmatpush1.msra.mxu0 %v76
    %965 = vmatprep.subr.mxu0 %v80
    %966 = vmatpush1.msra.mxu0 %v79
    %967 = vmatprep.subr.mxu0 %v83
    %968 = vmatpush1.msra.mxu0 %v82
    %969 = vmatprep.subr.mxu0 %v86
    %970 = vmatpush1.msra.mxu0 %v85
    %971 = vmatprep.subr.mxu0 %v89
    %972 = vmatpush1.msra.mxu0 %v88
    %973 = vmatprep.subr.mxu0 %v92
    %974 = vmatpush1.msra.mxu0 %v91
    %975 = vmatprep.subr.mxu0 %v95
    %976 = vmatpush1.msra.mxu0 %v94
    %977 = vmatprep.subr.mxu0 %v98
    %978 = vmatpush1.msra.mxu0 %v97
    %979 = vmatprep.subr.mxu0 %v101
    %980 = vmatpush1.msra.mxu0 %v100
    %981 = vmatprep.subr.mxu0 0.0
    %982 = vmatpush1.msra.mxu0 0.0
    %983 = vmatprep.subr.mxu0 0.0
    %984 = vmatpush1.msra.mxu0 0.0
    %985 = vmatprep.subr.mxu0 0.0
    %986 = vmatpush1.msra.mxu0 0.0
    %987 = vmatprep.subr.mxu0 0.0
    %988 = vmatpush1.msra.mxu0 0.0
    %989 = vmatprep.subr.mxu0 0.0
    %990 = vmatpush1.msra.mxu0 0.0
    %991 = vmatprep.subr.mxu0 0.0
    %992 = vmatpush1.msra.mxu0 0.0
    %993 = vmatprep.subr.mxu0 0.0
    %994 = vmatpush1.msra.mxu0 0.0
    %995 = vmatprep.subr.mxu0 0.0
    %996 = vmatpush1.msra.mxu0 0.0
    %997 = vmatprep.subr.mxu0 0.0
    %998 = vmatpush1.msra.mxu0 0.0
    %999 = vmatprep.subr.mxu0 0.0
    %1000 = vmatpush1.msra.mxu0 0.0
    %1001 = vmatprep.subr.mxu0 0.0
    %1002 = vmatpush1.msra.mxu0 0.0
    %1003 = vmatprep.subr.mxu0 0.0
    %1004 = vmatpush1.msra.mxu0 0.0
    %1005 = vmatprep.subr.mxu0 0.0
    %1006 = vmatpush1.msra.mxu0 0.0
    %1007 = vmatprep.subr.mxu0 0.0
    %1008 = vmatpush1.msra.mxu0 0.0
    %1009 = vmatprep.subr.mxu0 0.0
    %1010 = vmatpush1.msra.mxu0 0.0
    %1011 = vmatprep.subr.mxu0 0.0
    %1012 = vmatpush1.msra.mxu0 0.0
    %1013 = vmatprep.mubr.f32.mxu0 0.0
    %1014 = vmatmul.mubr.f32.gmra.mrb[0].mxu0 %v944
    %v1015 = vpop.f32.mrb[0].mxu0
    %v1016 = vadd.f32 0.0, %v1015
    %v1017 = vpop.f32.mrb[0].mxu0
    %v1018 = vadd.f32 0.0, %v1017
    %1019 = vdwg.mxu0
    %1020 = vmatprep.subr.mxu0 0.0
    %1021 = vmatpush1.msra.mxu0 %v57
    %1022 = vmatprep.subr.mxu0 0.0
    %1023 = vmatpush1.msra.mxu0 %v60
    %1024 = vmatprep.subr.mxu0 0.0
    %1025 = vmatpush1.msra.mxu0 %v63
    %1026 = vmatprep.subr.mxu0 0.0
    %1027 = vmatpush1.msra.mxu0 %v66
    %1028 = vmatprep.subr.mxu0 0.0
    %1029 = vmatpush1.msra.mxu0 %v69
    %1030 = vmatprep.subr.mxu0 0.0
    %1031 = vmatpush1.msra.mxu0 %v72
    %1032 = vmatprep.subr.mxu0 0.0
    %1033 = vmatpush1.msra.mxu0 %v75
    %1034 = vmatprep.subr.mxu0 0.0
    %1035 = vmatpush1.msra.mxu0 %v78
    %1036 = vmatprep.subr.mxu0 0.0
    %1037 = vmatpush1.msra.mxu0 %v81
    %1038 = vmatprep.subr.mxu0 0.0
    %1039 = vmatpush1.msra.mxu0 %v84
    %1040 = vmatprep.subr.mxu0 0.0
    %1041 = vmatpush1.msra.mxu0 %v87
    %1042 = vmatprep.subr.mxu0 0.0
    %1043 = vmatpush1.msra.mxu0 %v90
    %1044 = vmatprep.subr.mxu0 0.0
    %1045 = vmatpush1.msra.mxu0 %v93
    %1046 = vmatprep.subr.mxu0 0.0
    %1047 = vmatpush1.msra.mxu0 %v96
    %1048 = vmatprep.subr.mxu0 0.0
    %1049 = vmatpush1.msra.mxu0 %v99
    %1050 = vmatprep.subr.mxu0 0.0
    %1051 = vmatpush1.msra.mxu0 %v102
    %1052 = vmatprep.subr.mxu0 0.0
    %1053 = vmatpush1.msra.mxu0 0.0
    %1054 = vmatprep.subr.mxu0 0.0
    %1055 = vmatpush1.msra.mxu0 0.0
    %1056 = vmatprep.subr.mxu0 0.0
    %1057 = vmatpush1.msra.mxu0 0.0
    %1058 = vmatprep.subr.mxu0 0.0
    %1059 = vmatpush1.msra.mxu0 0.0
    %1060 = vmatprep.subr.mxu0 0.0
    %1061 = vmatpush1.msra.mxu0 0.0
    %1062 = vmatprep.subr.mxu0 0.0
    %1063 = vmatpush1.msra.mxu0 0.0
    %1064 = vmatprep.subr.mxu0 0.0
    %1065 = vmatpush1.msra.mxu0 0.0
    %1066 = vmatprep.subr.mxu0 0.0
    %1067 = vmatpush1.msra.mxu0 0.0
    %1068 = vmatprep.subr.mxu0 0.0
    %1069 = vmatpush1.msra.mxu0 0.0
    %1070 = vmatprep.subr.mxu0 0.0
    %1071 = vmatpush1.msra.mxu0 0.0
    %1072 = vmatprep.subr.mxu0 0.0
    %1073 = vmatpush1.msra.mxu0 0.0
    %1074 = vmatprep.subr.mxu0 0.0
    %1075 = vmatpush1.msra.mxu0 0.0
    %1076 = vmatprep.subr.mxu0 0.0
    %1077 = vmatpush1.msra.mxu0 0.0
    %1078 = vmatprep.subr.mxu0 0.0
    %1079 = vmatpush1.msra.mxu0 0.0
    %1080 = vmatprep.subr.mxu0 0.0
    %1081 = vmatpush1.msra.mxu0 0.0
    %1082 = vmatprep.subr.mxu0 0.0
    %1083 = vmatpush1.msra.mxu0 0.0
    %1084 = vmatprep.mubr.f32.mxu0 0.0
    %1085 = vmatmul.mubr.f32.gmra.mrb[0].mxu0 %v944
    %v1086 = vpop.f32.mrb[0].mxu0
    %v1087 = vadd.f32 0.0, %v1086
    %v1088 = vpop.f32.mrb[0].mxu0
    %1089 = vdwg.mxu0
    %v1090 = vadd.f32 %v946, %v1016
    %v1091 = vadd.f32 %v947, %v1018
    %v1092 = vxor.u32 %v1090, 2147483648
    %v1093 = vxor.u32 %v1091, 2147483648
    %v1094 = vmul.f32 %v1092, 1.442695
    %v1095 = vpow.pop %v1094
    %v1096 = vmul.f32 %v1093, 1.442695
    %v1097 = vpow.pop %v1096
    %v1098 = vadd.f32 %v1095, 1.0
    %v1099 = vadd.f32 %v1097, 1.0
    %v1100 = vrcp.pop %v1098
    %v1101 = vmul.f32 1.0, %v1100
    %v1102 = vrcp.pop %v1099
    %v1103 = vmul.f32 1.0, %v1102
    %v1104 = vadd.f32 %v1087, %v108
    %v1105 = vmul.f32 %v1101, %v1104
    %v1106 = vadd.f32 %v948, %v1105
    %v1107 = vtanh.pop %v1106
    %v1108 = vsub.f32 1.0, %v1103
    %v1109 = vmul.f32 %v1108, %v1107
    %v1110 = vmul.f32 %v1103, %v944
    %v1111 = vadd.f32 %v1109, %v1110
    %s1112 = scalar_lea.vmem [#allocation4], 144
    %v1113 = vld [vmem:[%s1112] sm:$0xff]
    %v1114 = vld [vmem:[%s1112 + $0x8] sm:$0xff]
    %v1115 = vld [vmem:[%s1112 + $0x10] sm:$0xff]
    %1116 = vmatprep.subr.mxu0 %v56
    %1117 = vmatpush1.msra.mxu0 %v55
    %1118 = vmatprep.subr.mxu0 %v59
    %1119 = vmatpush1.msra.mxu0 %v58
    %1120 = vmatprep.subr.mxu0 %v62
    %1121 = vmatpush1.msra.mxu0 %v61
    %1122 = vmatprep.subr.mxu0 %v65
    %1123 = vmatpush1.msra.mxu0 %v64
    %1124 = vmatprep.subr.mxu0 %v68
    %1125 = vmatpush1.msra.mxu0 %v67
    %1126 = vmatprep.subr.mxu0 %v71
    %1127 = vmatpush1.msra.mxu0 %v70
    %1128 = vmatprep.subr.mxu0 %v74
    %1129 = vmatpush1.msra.mxu0 %v73
    %1130 = vmatprep.subr.mxu0 %v77
    %1131 = vmatpush1.msra.mxu0 %v76
    %1132 = vmatprep.subr.mxu0 %v80
    %1133 = vmatpush1.msra.mxu0 %v79
    %1134 = vmatprep.subr.mxu0 %v83
    %1135 = vmatpush1.msra.mxu0 %v82
    %1136 = vmatprep.subr.mxu0 %v86
    %1137 = vmatpush1.msra.mxu0 %v85
    %1138 = vmatprep.subr.mxu0 %v89
    %1139 = vmatpush1.msra.mxu0 %v88
    %1140 = vmatprep.subr.mxu0 %v92
    %1141 = vmatpush1.msra.mxu0 %v91
    %1142 = vmatprep.subr.mxu0 %v95
    %1143 = vmatpush1.msra.mxu0 %v94
    %1144 = vmatprep.subr.mxu0 %v98
    %1145 = vmatpush1.msra.mxu0 %v97
    %1146 = vmatprep.subr.mxu0 %v101
    %1147 = vmatpush1.msra.mxu0 %v100
    %1148 = vmatprep.subr.mxu0 0.0
    %1149 = vmatpush1.msra.mxu0 0.0
    %1150 = vmatprep.subr.mxu0 0.0
    %1151 = vmatpush1.msra.mxu0 0.0
    %1152 = vmatprep.subr.mxu0 0.0
    %1153 = vmatpush1.msra.mxu0 0.0
    %1154 = vmatprep.subr.mxu0 0.0
    %1155 = vmatpush1.msra.mxu0 0.0
    %1156 = vmatprep.subr.mxu0 0.0
    %1157 = vmatpush1.msra.mxu0 0.0
    %1158 = vmatprep.subr.mxu0 0.0
    %1159 = vmatpush1.msra.mxu0 0.0
    %1160 = vmatprep.subr.mxu0 0.0
    %1161 = vmatpush1.msra.mxu0 0.0
    %1162 = vmatprep.subr.mxu0 0.0
    %1163 = vmatpush1.msra.mxu0 0.0
    %1164 = vmatprep.subr.mxu0 0.0
    %1165 = vmatpush1.msra.mxu0 0.0
    %1166 = vmatprep.subr.mxu0 0.0
    %1167 = vmatpush1.msra.mxu0 0.0
    %1168 = vmatprep.subr.mxu0 0.0
    %1169 = vmatpush1.msra.mxu0 0.0
    %1170 = vmatprep.subr.mxu0 0.0
    %1171 = vmatpush1.msra.mxu0 0.0
    %1172 = vmatprep.subr.mxu0 0.0
    %1173 = vmatpush1.msra.mxu0 0.0
    %1174 = vmatprep.subr.mxu0 0.0
    %1175 = vmatpush1.msra.mxu0 0.0
    %1176 = vmatprep.subr.mxu0 0.0
    %1177 = vmatpush1.msra.mxu0 0.0
    %1178 = vmatprep.subr.mxu0 0.0
    %1179 = vmatpush1.msra.mxu0 0.0
    %1180 = vmatprep.mubr.f32.mxu0 0.0
    %1181 = vmatmul.mubr.f32.gmra.mrb[0].mxu0 %v1111
    %v1182 = vpop.f32.mrb[0].mxu0
    %v1183 = vadd.f32 0.0, %v1182
    %v1184 = vpop.f32.mrb[0].mxu0
    %v1185 = vadd.f32 0.0, %v1184
    %1186 = vdwg.mxu0
    %1187 = vmatprep.subr.mxu0 0.0
    %1188 = vmatpush1.msra.mxu0 %v57
    %1189 = vmatprep.subr.mxu0 0.0
    %1190 = vmatpush1.msra.mxu0 %v60
    %1191 = vmatprep.subr.mxu0 0.0
    %1192 = vmatpush1.msra.mxu0 %v63
    %1193 = vmatprep.subr.mxu0 0.0
    %1194 = vmatpush1.msra.mxu0 %v66
    %1195 = vmatprep.subr.mxu0 0.0
    %1196 = vmatpush1.msra.mxu0 %v69
    %1197 = vmatprep.subr.mxu0 0.0
    %1198 = vmatpush1.msra.mxu0 %v72
    %1199 = vmatprep.subr.mxu0 0.0
    %1200 = vmatpush1.msra.mxu0 %v75
    %1201 = vmatprep.subr.mxu0 0.0
    %1202 = vmatpush1.msra.mxu0 %v78
    %1203 = vmatprep.subr.mxu0 0.0
    %1204 = vmatpush1.msra.mxu0 %v81
    %1205 = vmatprep.subr.mxu0 0.0
    %1206 = vmatpush1.msra.mxu0 %v84
    %1207 = vmatprep.subr.mxu0 0.0
    %1208 = vmatpush1.msra.mxu0 %v87
    %1209 = vmatprep.subr.mxu0 0.0
    %1210 = vmatpush1.msra.mxu0 %v90
    %1211 = vmatprep.subr.mxu0 0.0
    %1212 = vmatpush1.msra.mxu0 %v93
    %1213 = vmatprep.subr.mxu0 0.0
    %1214 = vmatpush1.msra.mxu0 %v96
    %1215 = vmatprep.subr.mxu0 0.0
    %1216 = vmatpush1.msra.mxu0 %v99
    %1217 = vmatprep.subr.mxu0 0.0
    %1218 = vmatpush1.msra.mxu0 %v102
    %1219 = vmatprep.subr.mxu0 0.0
    %1220 = vmatpush1.msra.mxu0 0.0
    %1221 = vmatprep.subr.mxu0 0.0
    %1222 = vmatpush1.msra.mxu0 0.0
    %1223 = vmatprep.subr.mxu0 0.0
    %1224 = vmatpush1.msra.mxu0 0.0
    %1225 = vmatprep.subr.mxu0 0.0
    %1226 = vmatpush1.msra.mxu0 0.0
    %1227 = vmatprep.subr.mxu0 0.0
    %1228 = vmatpush1.msra.mxu0 0.0
    %1229 = vmatprep.subr.mxu0 0.0
    %1230 = vmatpush1.msra.mxu0 0.0
    %1231 = vmatprep.subr.mxu0 0.0
    %1232 = vmatpush1.msra.mxu0 0.0
    %1233 = vmatprep.subr.mxu0 0.0
    %1234 = vmatpush1.msra.mxu0 0.0
    %1235 = vmatprep.subr.mxu0 0.0
    %1236 = vmatpush1.msra.mxu0 0.0
    %1237 = vmatprep.subr.mxu0 0.0
    %1238 = vmatpush1.msra.mxu0 0.0
    %1239 = vmatprep.subr.mxu0 0.0
    %1240 = vmatpush1.msra.mxu0 0.0
    %1241 = vmatprep.subr.mxu0 0.0
    %1242 = vmatpush1.msra.mxu0 0.0
    %1243 = vmatprep.subr.mxu0 0.0
    %1244 = vmatpush1.msra.mxu0 0.0
    %1245 = vmatprep.subr.mxu0 0.0
    %1246 = vmatpush1.msra.mxu0 0.0
    %1247 = vmatprep.subr.mxu0 0.0
    %1248 = vmatpush1.msra.mxu0 0.0
    %1249 = vmatprep.subr.mxu0 0.0
    %1250 = vmatpush1.msra.mxu0 0.0
    %1251 = vmatprep.mubr.f32.mxu0 0.0
    %1252 = vmatmul.mubr.f32.gmra.mrb[0].mxu0 %v1111
    %v1253 = vpop.f32.mrb[0].mxu0
    %v1254 = vadd.f32 0.0, %v1253
    %v1255 = vpop.f32.mrb[0].mxu0
    %1256 = vdwg.mxu0
    %v1257 = vadd.f32 %v1113, %v1183
    %v1258 = vadd.f32 %v1114, %v1185
    %v1259 = vxor.u32 %v1257, 2147483648
    %v1260 = vxor.u32 %v1258, 2147483648
    %v1261 = vmul.f32 %v1259, 1.442695
    %v1262 = vpow.pop %v1261
    %v1263 = vmul.f32 %v1260, 1.442695
    %v1264 = vpow.pop %v1263
    %v1265 = vadd.f32 %v1262, 1.0
    %v1266 = vadd.f32 %v1264, 1.0
    %v1267 = vrcp.pop %v1265
    %v1268 = vmul.f32 1.0, %v1267
    %v1269 = vrcp.pop %v1266
    %v1270 = vmul.f32 1.0, %v1269
    %v1271 = vadd.f32 %v1254, %v108
    %v1272 = vmul.f32 %v1268, %v1271
    %v1273 = vadd.f32 %v1115, %v1272
    %v1274 = vtanh.pop %v1273
    %v1275 = vsub.f32 1.0, %v1270
    %v1276 = vmul.f32 %v1275, %v1274
    %v1277 = vmul.f32 %v1270, %v1111
    %v1278 = vadd.f32 %v1276, %v1277
    %s1279 = scalar_lea.vmem [#allocation4], 168
    %v1280 = vld [vmem:[%s1279] sm:$0xff]
    %v1281 = vld [vmem:[%s1279 + $0x8] sm:$0xff]
    %v1282 = vld [vmem:[%s1279 + $0x10] sm:$0xff]
    %1283 = vmatprep.subr.mxu0 %v56
    %1284 = vmatpush1.msra.mxu0 %v55
    %1285 = vmatprep.subr.mxu0 %v59
    %1286 = vmatpush1.msra.mxu0 %v58
    %1287 = vmatprep.subr.mxu0 %v62
    %1288 = vmatpush1.msra.mxu0 %v61
    %1289 = vmatprep.subr.mxu0 %v65
    %1290 = vmatpush1.msra.mxu0 %v64
    %1291 = vmatprep.subr.mxu0 %v68
    %1292 = vmatpush1.msra.mxu0 %v67
    %1293 = vmatprep.subr.mxu0 %v71
    %1294 = vmatpush1.msra.mxu0 %v70
    %1295 = vmatprep.subr.mxu0 %v74
    %1296 = vmatpush1.msra.mxu0 %v73
    %1297 = vmatprep.subr.mxu0 %v77
    %1298 = vmatpush1.msra.mxu0 %v76
    %1299 = vmatprep.subr.mxu0 %v80
    %1300 = vmatpush1.msra.mxu0 %v79
    %1301 = vmatprep.subr.mxu0 %v83
    %1302 = vmatpush1.msra.mxu0 %v82
    %1303 = vmatprep.subr.mxu0 %v86
    %1304 = vmatpush1.msra.mxu0 %v85
    %1305 = vmatprep.subr.mxu0 %v89
    %1306 = vmatpush1.msra.mxu0 %v88
    %1307 = vmatprep.subr.mxu0 %v92
    %1308 = vmatpush1.msra.mxu0 %v91
    %1309 = vmatprep.subr.mxu0 %v95
    %1310 = vmatpush1.msra.mxu0 %v94
    %1311 = vmatprep.subr.mxu0 %v98
    %1312 = vmatpush1.msra.mxu0 %v97
    %1313 = vmatprep.subr.mxu0 %v101
    %1314 = vmatpush1.msra.mxu0 %v100
    %1315 = vmatprep.subr.mxu0 0.0
    %1316 = vmatpush1.msra.mxu0 0.0
    %1317 = vmatprep.subr.mxu0 0.0
    %1318 = vmatpush1.msra.mxu0 0.0
    %1319 = vmatprep.subr.mxu0 0.0
    %1320 = vmatpush1.msra.mxu0 0.0
    %1321 = vmatprep.subr.mxu0 0.0
    %1322 = vmatpush1.msra.mxu0 0.0
    %1323 = vmatprep.subr.mxu0 0.0
    %1324 = vmatpush1.msra.mxu0 0.0
    %1325 = vmatprep.subr.mxu0 0.0
    %1326 = vmatpush1.msra.mxu0 0.0
    %1327 = vmatprep.subr.mxu0 0.0
    %1328 = vmatpush1.msra.mxu0 0.0
    %1329 = vmatprep.subr.mxu0 0.0
    %1330 = vmatpush1.msra.mxu0 0.0
    %1331 = vmatprep.subr.mxu0 0.0
    %1332 = vmatpush1.msra.mxu0 0.0
    %1333 = vmatprep.subr.mxu0 0.0
    %1334 = vmatpush1.msra.mxu0 0.0
    %1335 = vmatprep.subr.mxu0 0.0
    %1336 = vmatpush1.msra.mxu0 0.0
    %1337 = vmatprep.subr.mxu0 0.0
    %1338 = vmatpush1.msra.mxu0 0.0
    %1339 = vmatprep.subr.mxu0 0.0
    %1340 = vmatpush1.msra.mxu0 0.0
    %1341 = vmatprep.subr.mxu0 0.0
    %1342 = vmatpush1.msra.mxu0 0.0
    %1343 = vmatprep.subr.mxu0 0.0
    %1344 = vmatpush1.msra.mxu0 0.0
    %1345 = vmatprep.subr.mxu0 0.0
    %1346 = vmatpush1.msra.mxu0 0.0
    %1347 = vmatprep.mubr.f32.mxu0 0.0
    %1348 = vmatmul.mubr.f32.gmra.mrb[0].mxu0 %v1278
    %v1349 = vpop.f32.mrb[0].mxu0
    %v1350 = vadd.f32 0.0, %v1349
    %v1351 = vpop.f32.mrb[0].mxu0
    %v1352 = vadd.f32 0.0, %v1351
    %1353 = vdwg.mxu0
    %1354 = vmatprep.subr.mxu0 0.0
    %1355 = vmatpush1.msra.mxu0 %v57
    %1356 = vmatprep.subr.mxu0 0.0
    %1357 = vmatpush1.msra.mxu0 %v60
    %1358 = vmatprep.subr.mxu0 0.0
    %1359 = vmatpush1.msra.mxu0 %v63
    %1360 = vmatprep.subr.mxu0 0.0
    %1361 = vmatpush1.msra.mxu0 %v66
    %1362 = vmatprep.subr.mxu0 0.0
    %1363 = vmatpush1.msra.mxu0 %v69
    %1364 = vmatprep.subr.mxu0 0.0
    %1365 = vmatpush1.msra.mxu0 %v72
    %1366 = vmatprep.subr.mxu0 0.0
    %1367 = vmatpush1.msra.mxu0 %v75
    %1368 = vmatprep.subr.mxu0 0.0
    %1369 = vmatpush1.msra.mxu0 %v78
    %1370 = vmatprep.subr.mxu0 0.0
    %1371 = vmatpush1.msra.mxu0 %v81
    %1372 = vmatprep.subr.mxu0 0.0
    %1373 = vmatpush1.msra.mxu0 %v84
    %1374 = vmatprep.subr.mxu0 0.0
    %1375 = vmatpush1.msra.mxu0 %v87
    %1376 = vmatprep.subr.mxu0 0.0
    %1377 = vmatpush1.msra.mxu0 %v90
    %1378 = vmatprep.subr.mxu0 0.0
    %1379 = vmatpush1.msra.mxu0 %v93
    %1380 = vmatprep.subr.mxu0 0.0
    %1381 = vmatpush1.msra.mxu0 %v96
    %1382 = vmatprep.subr.mxu0 0.0
    %1383 = vmatpush1.msra.mxu0 %v99
    %1384 = vmatprep.subr.mxu0 0.0
    %1385 = vmatpush1.msra.mxu0 %v102
    %1386 = vmatprep.subr.mxu0 0.0
    %1387 = vmatpush1.msra.mxu0 0.0
    %1388 = vmatprep.subr.mxu0 0.0
    %1389 = vmatpush1.msra.mxu0 0.0
    %1390 = vmatprep.subr.mxu0 0.0
    %1391 = vmatpush1.msra.mxu0 0.0
    %1392 = vmatprep.subr.mxu0 0.0
    %1393 = vmatpush1.msra.mxu0 0.0
    %1394 = vmatprep.subr.mxu0 0.0
    %1395 = vmatpush1.msra.mxu0 0.0
    %1396 = vmatprep.subr.mxu0 0.0
    %1397 = vmatpush1.msra.mxu0 0.0
    %1398 = vmatprep.subr.mxu0 0.0
    %1399 = vmatpush1.msra.mxu0 0.0
    %1400 = vmatprep.subr.mxu0 0.0
    %1401 = vmatpush1.msra.mxu0 0.0
    %1402 = vmatprep.subr.mxu0 0.0
    %1403 = vmatpush1.msra.mxu0 0.0
    %1404 = vmatprep.subr.mxu0 0.0
    %1405 = vmatpush1.msra.mxu0 0.0
    %1406 = vmatprep.subr.mxu0 0.0
    %1407 = vmatpush1.msra.mxu0 0.0
    %1408 = vmatprep.subr.mxu0 0.0
    %1409 = vmatpush1.msra.mxu0 0.0
    %1410 = vmatprep.subr.mxu0 0.0
    %1411 = vmatpush1.msra.mxu0 0.0
    %1412 = vmatprep.subr.mxu0 0.0
    %1413 = vmatpush1.msra.mxu0 0.0
    %1414 = vmatprep.subr.mxu0 0.0
    %1415 = vmatpush1.msra.mxu0 0.0
    %1416 = vmatprep.subr.mxu0 0.0
    %1417 = vmatpush1.msra.mxu0 0.0
    %1418 = vmatprep.mubr.f32.mxu0 0.0
    %1419 = vmatmul.mubr.f32.gmra.mrb[0].mxu0 %v1278
    %v1420 = vpop.f32.mrb[0].mxu0
    %v1421 = vadd.f32 0.0, %v1420
    %v1422 = vpop.f32.mrb[0].mxu0
    %1423 = vdwg.mxu0
    %v1424 = vadd.f32 %v1280, %v1350
    %v1425 = vadd.f32 %v1281, %v1352
    %v1426 = vxor.u32 %v1424, 2147483648
    %v1427 = vxor.u32 %v1425, 2147483648
    %v1428 = vmul.f32 %v1426, 1.442695
    %v1429 = vpow.pop %v1428
    %v1430 = vmul.f32 %v1427, 1.442695
    %v1431 = vpow.pop %v1430
    %v1432 = vadd.f32 %v1429, 1.0
    %v1433 = vadd.f32 %v1431, 1.0
    %v1434 = vrcp.pop %v1432
    %v1435 = vmul.f32 1.0, %v1434
    %v1436 = vrcp.pop %v1433
    %v1437 = vmul.f32 1.0, %v1436
    %v1438 = vadd.f32 %v1421, %v108
    %v1439 = vmul.f32 %v1435, %v1438
    %v1440 = vadd.f32 %v1282, %v1439
    %v1441 = vtanh.pop %v1440
    %v1442 = vsub.f32 1.0, %v1437
    %v1443 = vmul.f32 %v1442, %v1441
    %v1444 = vmul.f32 %v1437, %v1278
    %v1445 = vadd.f32 %v1443, %v1444
    %1446 = vst [vmem:[#allocation2] sm:$0xff] %v1445
    // Predicated region
    $region34: #{tpu_custom_call.1} parent=1 // pred_check
      %p1447 = pneg %p50
    $region35: #{tpu_custom_call.1} parent=1 // pred_check_branch
      %1449 = sbr.rel (%p1447) target = $region37
    $region36: #{tpu_custom_call.1} parent=1 // pred_region
      %v1450 = vld [vmem:[%s3] sm:$0x1]
      %v1452 = vlaneseq
      %v1453 = vshrl.u32 %v1452, 7
      %v1454 = vsub.s32 0, %v1453
      %v1455 = vrot.slane %v1450, %v1454
      %v1457 = vmul.f32 %v1445, %v1455
      %1458 = vadd.xlane.f32.xlu0 %v1457
      %v1459 = vpop.xlane.xlu0 %1458
      %v1460 = vld [vmem:[#allocation3] sm:$0x1]
      %v1462 = vlaneseq
      %v1463 = vshrl.u32 %v1462, 7
      %v1464 = vsub.s32 0, %v1463
      %v1465 = vrot.slane %v1460, %v1464
      %v1467 = vadd.f32 %v1459, %v1465
      %vm1468 = vcmask 7168
      %1469 = vst.msk [vmem:[%s5] sm:$0xff] %vm1468, %v1467
    $region37: #{tpu_custom_call.1} parent=1 // pred_fallthru
      _
    // Predicated region
    $region38: #{tpu_custom_call.1} parent=1 // pred_check
      _
    $region39: #{tpu_custom_call.1} parent=1 // pred_check_branch
      %1471 = sbr.rel (0) target = $region41
    $region40: #{tpu_custom_call.1} parent=1 // pred_region
      _
    $region41: #{tpu_custom_call.1} parent=1 // pred_fallthru
      _
    // Predicated region
    $region42: #{tpu_custom_call.1} parent=1 // pred_check
      _
    $region43: #{tpu_custom_call.1} parent=1 // pred_check_branch
      %1473 = sbr.rel (0) target = $region45
    $region44: #{tpu_custom_call.1} parent=1 // pred_region
      _
    $region45: #{tpu_custom_call.1} parent=1 // pred_fallthru
      _
    %1474 = vsyncpa [#allocation5], 1
    %1475 = vsyncpa [#allocation7], 1

</llo_original>
